<compile_context>
chip_gen: v6e
topology: v6e:2x2x1
jax: 0.10.0
libtpu: 0.0.40
codegen_flags: <defaults>
</compile_context>

<pallas_src>
import functools

import jax
import jax.numpy as jnp
from jax.experimental import pallas as pl
from jax.experimental.pallas import tpu as pltpu


def _round_up(x, m):
    return (x + m - 1) // m * m


# ----------------------------------------------------------------------------
# Fused kernel: conv-GEMM + shift-add + max-pool + bias + ReLU + fc2 + fc1
# ----------------------------------------------------------------------------
def _fused_kernel(emb_ref, wall_ref, cbias_ref, w2_ref, b2_ref, w1_ref, b1_ref,
                  hid_ref, log_ref, *, Ks, CoP, Bt, Lp, L):
    NG = wall_ref.shape[-1]

    # One lane-dense MXU GEMM covering every (branch, tap) column group.
    # emb_ref is already 2-D (Bt*Lp, D) -> no input-side reshape in the kernel.
    s = jnp.dot(emb_ref[...], wall_ref[...],
                preferred_element_type=jnp.float32)        # (Bt*Lp, NG) f32
    # Split the leading dim only (Lp is a multiple of 8 -> layout-preserving).
    s = s.reshape(Bt, Lp, NG)

    # Per-branch sliding-window add + full-length max-pool.
    # All lane slices are 128-aligned (each tap owns a CoP=round_up(Co,128)
    # wide column group); padded rows (l >= L) never enter a valid window
    # because l + k <= Lout - 1 + (K - 1) = L - 1.
    pooled = []
    base = 0
    for K in Ks:
        Lout = L - K + 1
        acc = s[:, 0:Lout, base:base + CoP]
        for k in range(1, K):
            acc = acc + s[:, k:k + Lout, base + k * CoP:base + (k + 1) * CoP]
        pooled.append(jnp.max(acc, axis=1))                 # (Bt, CoP)
        base += K * CoP
    feat = jnp.concatenate(pooled, axis=1)                  # (Bt, len(Ks)*CoP)

    # bias + ReLU hoisted past the max-pool (exact: max/ReLU are monotone).
    feat = jnp.maximum(feat + cbias_ref[...], 0.0)

    # fc2 -> fc1 head (tiny; f32, lane-dense padded weights/outputs).
    hidden = jnp.dot(feat, w2_ref[...],
                     preferred_element_type=jnp.float32) + b2_ref[...]
    hid_ref[...] = hidden
    log_ref[...] = jnp.dot(hidden, w1_ref[...],
                           preferred_element_type=jnp.float32) + b1_ref[...]


# ----------------------------------------------------------------------------
# Wrapper (weight packing, padding, grid setup)
# ----------------------------------------------------------------------------
def cnn_text_forward(token_ids, params, kernel_sizes, *, b_tile=64,
                     matmul_dtype=jnp.bfloat16):
    Ks = tuple(int(k) for k in kernel_sizes)
    nK = len(Ks)
    Co = params["conv_w"][0].shape[-1]
    D = params["embed"].shape[-1]
    B, L = token_ids.shape
    assert L >= max(Ks), "sequence shorter than largest conv kernel"

    CoP = _round_up(Co, 128)           # 128-lane-aligned per-tap column group
    NG = sum(Ks) * CoP                 # conv GEMM N (lane-dense, 128-multiple)
    Fp = nK * CoP                      # padded pooled-feature width
    H = params["fc2_w"].shape[-1]
    C = params["fc1_w"].shape[-1]
    Hp = _round_up(H, 128)
    Cp = _round_up(C, 128)
    Lp = _round_up(L, 8)               # sublane-aligned sequence length

    # ---- batch tiling: large tiles, clamped to the (padded) batch --------
    b_tile = max(8, _round_up(int(b_tile), 8))
    bt = min(b_tile, _round_up(B, 8))
    Bp = _round_up(B, bt)
    nb = Bp // bt
    assert Bp % bt == 0

    # ---- embedding lookup (glue gather), bf16 feeds the conv GEMM --------
    emb = jnp.take(params["embed"], token_ids, axis=0).astype(matmul_dtype)
    if Bp != B or Lp != L:
        emb = jnp.pad(emb, ((0, Bp - B), (0, Lp - L), (0, 0)))
    emb2d = emb.reshape(Bp * Lp, D)    # lane-dense 2-D activation slab

    # ---- pack conv taps into one lane-dense slab, each tap CoP wide ------
    # column layout: [branch0 tap0 | branch0 tap1 | ... | branch1 tap0 | ...]
    w_parts = []
    for w, K in zip(params["conv_w"], Ks):            # w: (K, D, Co)
        wp = jnp.pad(w, ((0, 0), (0, 0), (0, CoP - Co)))          # (K, D, CoP)
        w_parts.append(wp.transpose(1, 0, 2).reshape(D, K * CoP))  # (D, K*CoP)
    w_all = jnp.concatenate(w_parts, axis=1).astype(matmul_dtype)  # (D, NG)

    cbias = jnp.concatenate(
        [jnp.pad(b, ((0, 0), (0, CoP - Co))) for b in params["conv_b"]],
        axis=1).astype(jnp.float32)                                 # (1, Fp)

    # fc2 rows laid out to match the padded pooled-feature lanes.
    w2p = params["fc2_w"].reshape(nK, Co, H)
    w2p = jnp.pad(w2p, ((0, 0), (0, CoP - Co), (0, Hp - H)))
    w2p = w2p.reshape(Fp, Hp).astype(jnp.float32)                   # (Fp, Hp)
    b2p = jnp.pad(params["fc2_b"], ((0, 0), (0, Hp - H))).astype(jnp.float32)
    w1p = jnp.pad(params["fc1_w"], ((0, Hp - H), (0, Cp - C))).astype(jnp.float32)
    b1p = jnp.pad(params["fc1_b"], ((0, 0), (0, Cp - C))).astype(jnp.float32)

    grid_spec = pltpu.PrefetchScalarGridSpec(
        num_scalar_prefetch=0,
        grid=(nb,),
        in_specs=[
            # streamed activation tile (double-buffered by the pipeline)
            pl.BlockSpec((bt * Lp, D), lambda i: (i, 0)),
            # resident weights (constant block index -> loaded once)
            pl.BlockSpec((D, NG), lambda i: (0, 0)),
            pl.BlockSpec((1, Fp), lambda i: (0, 0)),
            pl.BlockSpec((Fp, Hp), lambda i: (0, 0)),
            pl.BlockSpec((1, Hp), lambda i: (0, 0)),
            pl.BlockSpec((Hp, Cp), lambda i: (0, 0)),
            pl.BlockSpec((1, Cp), lambda i: (0, 0)),
        ],
        out_specs=[
            pl.BlockSpec((bt, Hp), lambda i: (i, 0)),
            pl.BlockSpec((bt, Cp), lambda i: (i, 0)),
        ],
    )

    itemsize = jnp.dtype(matmul_dtype).itemsize
    flops = int(2 * Bp * Lp * D * NG + 2 * Bp * Fp * Hp + 2 * Bp * Hp * Cp)
    bytes_accessed = int(
        Bp * Lp * D * itemsize + D * NG * itemsize
        + (Fp + Fp * Hp + Hp + Hp * Cp + Cp) * 4
        + (Bp * Hp + Bp * Cp) * 4)

    kernel = functools.partial(_fused_kernel, Ks=Ks, CoP=CoP, Bt=bt, Lp=Lp, L=L)
    hid_p, log_p = pl.pallas_call(
        kernel,
        grid_spec=grid_spec,
        out_shape=(
            jax.ShapeDtypeStruct((Bp, Hp), jnp.float32),
            jax.ShapeDtypeStruct((Bp, Cp), jnp.float32),
        ),
        compiler_params=pltpu.CompilerParams(
            dimension_semantics=("parallel",),
            vmem_limit_bytes=64 * 1024 * 1024,
        ),
        cost_estimate=pl.CostEstimate(
            flops=flops, transcendentals=0, bytes_accessed=bytes_accessed),
    )(emb2d, w_all, cbias, w2p, b2p, w1p, b1p)

    # strip batch / lane padding
    return hid_p[:B, :H], log_p[:B, :C]


# ----------------------------------------------------------------------------
# Pure-JAX reference (f32) for correctness check
# ----------------------------------------------------------------------------
def cnn_text_ref(token_ids, params, kernel_sizes):
    emb = jnp.take(params["embed"], token_ids, axis=0)
    Bb, L, _ = emb.shape
    pooled = []
    for i, K in enumerate(kernel_sizes):
        w = params["conv_w"][i]  # (K, D, Co)
        b = params["conv_b"][i]  # (1, Co)
        Lout = L - K + 1
        acc = jnp.zeros((Bb, Lout, w.shape[-1]), jnp.float32)
        for k in range(K):
            acc = acc + jnp.einsum("bld,dc->blc", emb[:, k:k + Lout, :], w[k])
        acc = jnp.maximum(acc + b, 0.0)
        pooled.append(jnp.max(acc, axis=1))
    feat = jnp.concatenate(pooled, axis=1)
    hidden = feat @ params["fc2_w"] + params["fc2_b"]
    logit = hidden @ params["fc1_w"] + params["fc1_b"]
    return hidden, logit


# ----------------------------------------------------------------------------
# Main
# ----------------------------------------------------------------------------
if __name__ == "__main__":
    # Small synthetic config (stand-in for args / roberta-base):
    B, L = 16, 16          # batch, sequence length
    V, D = 100, 32         # vocab size, embedding dim
    Co = 8                 # args.kernel_num
    Ks = (3, 4, 5)         # args.kernel_sizes
    H = 16                 # args.hidden_size
    C = 4                  # args.class_num

    key = jax.random.PRNGKey(0)
    keys = jax.random.split(key, 4 + 2 * len(Ks))

    params = {
        "embed": jax.random.normal(keys[0], (V, D), jnp.float32) * 0.1,
        # PyTorch conv weight (Co, 1, K, D) is stored here as (K, D, Co).
        "conv_w": [
            jax.random.normal(keys[1 + i], (K, D, Co), jnp.float32) * 0.1
            for i, K in enumerate(Ks)
        ],
        "conv_b": [
            jax.random.normal(keys[1 + len(Ks) + i], (1, Co), jnp.float32) * 0.1
            for i in range(len(Ks))
        ],
        # nn.Linear stores (out, in); here we keep (in, out) and use x @ W.
        "fc2_w": jax.random.normal(keys[1 + 2 * len(Ks)], (len(Ks) * Co, H),
                                   jnp.float32) * 0.1,
        "fc2_b": jax.random.normal(keys[2 + 2 * len(Ks)], (1, H),
                                   jnp.float32) * 0.1,
        "fc1_w": jax.random.normal(keys[3 + 2 * len(Ks)], (H, C),
                                   jnp.float32) * 0.1,
        "fc1_b": jnp.zeros((1, C), jnp.float32),
    }

    token_ids = jax.random.randint(key, (B, L), 0, V, dtype=jnp.int32)

    # bf16 matmul-input path (default, production config)
    hid_bf16, log_bf16 = cnn_text_forward(token_ids, params, Ks)
    jax.block_until_ready((hid_bf16, log_bf16))

    # f32 matmul-input path (exactness check of the fused structure)
    hid_f32, log_f32 = cnn_text_forward(token_ids, params, Ks,
                                        matmul_dtype=jnp.float32)
    jax.block_until_ready((hid_f32, log_f32))

    hid_ref, log_ref = cnn_text_ref(token_ids, params, Ks)

    assert hid_f32.shape == (B, H) and log_f32.shape == (B, C)
    assert jnp.allclose(hid_f32, hid_ref, atol=1e-4, rtol=1e-4)
    assert jnp.allclose(log_f32, log_ref, atol=1e-4, rtol=1e-4)
    assert jnp.allclose(hid_bf16, hid_ref, atol=3e-2, rtol=3e-2)
    assert jnp.allclose(log_bf16, log_ref, atol=3e-2, rtol=3e-2)

    print("KERNEL_OK")
</pallas_src>

<mosaic_0001>
module attributes {stable_mosaic.version = 11 : i64} {
  func.func @_fused_kernel(%arg0: i32, %arg1: memref<256x32xbf16, #tpu.memory_space<vmem>>, %arg2: memref<32x1536xbf16, #tpu.memory_space<vmem>>, %arg3: memref<1x384xf32, #tpu.memory_space<vmem>>, %arg4: memref<384x128xf32, #tpu.memory_space<vmem>>, %arg5: memref<1x128xf32, #tpu.memory_space<vmem>>, %arg6: memref<128x128xf32, #tpu.memory_space<vmem>>, %arg7: memref<1x128xf32, #tpu.memory_space<vmem>>, %arg8: memref<16x128xf32, #tpu.memory_space<vmem>>, %arg9: memref<16x128xf32, #tpu.memory_space<vmem>>) attributes {dimension_semantics = [#tpu.dimension_semantics<parallel>], iteration_bounds = array<i64: 1>, scalar_prefetch = 0 : i64, scratch_operands = 0 : i64, tpu.core_type = #tpu.core_type<tc>, window_params = [{transform_indices = @transform_0, window_bounds = array<i64: 256, 32>}, {pipeline_mode = #tpu.pipeline_mode<synchronous>, transform_indices = @transform_1, window_bounds = array<i64: 32, 1536>}, {pipeline_mode = #tpu.pipeline_mode<synchronous>, transform_indices = @transform_2, window_bounds = array<i64: 1, 384>}, {pipeline_mode = #tpu.pipeline_mode<synchronous>, transform_indices = @transform_3, window_bounds = array<i64: 384, 128>}, {pipeline_mode = #tpu.pipeline_mode<synchronous>, transform_indices = @transform_4, window_bounds = array<i64: 1, 128>}, {pipeline_mode = #tpu.pipeline_mode<synchronous>, transform_indices = @transform_5, window_bounds = array<i64: 128, 128>}, {pipeline_mode = #tpu.pipeline_mode<synchronous>, transform_indices = @transform_6, window_bounds = array<i64: 1, 128>}, {transform_indices = @transform_7, window_bounds = array<i64: 16, 128>}, {transform_indices = @transform_8, window_bounds = array<i64: 16, 128>}]} {
    %c0 = arith.constant 0 : index
    %c0_0 = arith.constant 0 : index
    %0 = vector.load %arg1[%c0, %c0_0] : memref<256x32xbf16, #tpu.memory_space<vmem>>, vector<256x32xbf16>
    %c0_1 = arith.constant 0 : index
    %c0_2 = arith.constant 0 : index
    %1 = vector.load %arg2[%c0_1, %c0_2] : memref<32x1536xbf16, #tpu.memory_space<vmem>>, vector<32x1536xbf16>
    %cst = arith.constant dense<0.000000e+00> : vector<256x1536xf32>
    %2 = tpu.matmul %0, %1, %cst {dimension_numbers = #tpu.dot_dimension_numbers<[1], [0], [0], [1], [0, 0, 1, 1], [], []>} : vector<256x32xbf16>, vector<32x1536xbf16>, vector<256x1536xf32> -> vector<256x1536xf32>
    %3 = vector.shape_cast %2 : vector<256x1536xf32> to vector<16x16x1536xf32>
    %4 = vector.extract_strided_slice %3 {offsets = [0, 0, 0], sizes = [16, 14, 128], strides = [1, 1, 1]} : vector<16x16x1536xf32> to vector<16x14x128xf32>
    %5 = vector.extract_strided_slice %3 {offsets = [0, 1, 128], sizes = [16, 14, 128], strides = [1, 1, 1]} : vector<16x16x1536xf32> to vector<16x14x128xf32>
    %6 = arith.addf %4, %5 : vector<16x14x128xf32>
    %7 = vector.extract_strided_slice %3 {offsets = [0, 2, 256], sizes = [16, 14, 128], strides = [1, 1, 1]} : vector<16x16x1536xf32> to vector<16x14x128xf32>
    %8 = arith.addf %6, %7 : vector<16x14x128xf32>
    %cst_3 = arith.constant dense<0xFF800000> : vector<16x128xf32>
    %9 = vector.multi_reduction <maximumf>, %8, %cst_3 [1] : vector<16x14x128xf32> to vector<16x128xf32>
    %10 = vector.extract_strided_slice %3 {offsets = [0, 0, 384], sizes = [16, 13, 128], strides = [1, 1, 1]} : vector<16x16x1536xf32> to vector<16x13x128xf32>
    %11 = vector.extract_strided_slice %3 {offsets = [0, 1, 512], sizes = [16, 13, 128], strides = [1, 1, 1]} : vector<16x16x1536xf32> to vector<16x13x128xf32>
    %12 = arith.addf %10, %11 : vector<16x13x128xf32>
    %13 = vector.extract_strided_slice %3 {offsets = [0, 2, 640], sizes = [16, 13, 128], strides = [1, 1, 1]} : vector<16x16x1536xf32> to vector<16x13x128xf32>
    %14 = arith.addf %12, %13 : vector<16x13x128xf32>
    %15 = vector.extract_strided_slice %3 {offsets = [0, 3, 768], sizes = [16, 13, 128], strides = [1, 1, 1]} : vector<16x16x1536xf32> to vector<16x13x128xf32>
    %16 = arith.addf %14, %15 : vector<16x13x128xf32>
    %cst_4 = arith.constant dense<0xFF800000> : vector<16x128xf32>
    %17 = vector.multi_reduction <maximumf>, %16, %cst_4 [1] : vector<16x13x128xf32> to vector<16x128xf32>
    %18 = vector.extract_strided_slice %3 {offsets = [0, 0, 896], sizes = [16, 12, 128], strides = [1, 1, 1]} : vector<16x16x1536xf32> to vector<16x12x128xf32>
    %19 = vector.extract_strided_slice %3 {offsets = [0, 1, 1024], sizes = [16, 12, 128], strides = [1, 1, 1]} : vector<16x16x1536xf32> to vector<16x12x128xf32>
    %20 = arith.addf %18, %19 : vector<16x12x128xf32>
    %21 = vector.extract_strided_slice %3 {offsets = [0, 2, 1152], sizes = [16, 12, 128], strides = [1, 1, 1]} : vector<16x16x1536xf32> to vector<16x12x128xf32>
    %22 = arith.addf %20, %21 : vector<16x12x128xf32>
    %23 = vector.extract_strided_slice %3 {offsets = [0, 3, 1280], sizes = [16, 12, 128], strides = [1, 1, 1]} : vector<16x16x1536xf32> to vector<16x12x128xf32>
    %24 = arith.addf %22, %23 : vector<16x12x128xf32>
    %25 = vector.extract_strided_slice %3 {offsets = [0, 4, 1408], sizes = [16, 12, 128], strides = [1, 1, 1]} : vector<16x16x1536xf32> to vector<16x12x128xf32>
    %26 = arith.addf %24, %25 : vector<16x12x128xf32>
    %cst_5 = arith.constant dense<0xFF800000> : vector<16x128xf32>
    %27 = vector.multi_reduction <maximumf>, %26, %cst_5 [1] : vector<16x12x128xf32> to vector<16x128xf32>
    %28 = tpu.concatenate %9, %17, %27 in 1 : vector<16x128xf32>, vector<16x128xf32>, vector<16x128xf32> -> vector<16x384xf32>
    %c0_6 = arith.constant 0 : index
    %c0_7 = arith.constant 0 : index
    %29 = vector.load %arg3[%c0_6, %c0_7] : memref<1x384xf32, #tpu.memory_space<vmem>>, vector<1x384xf32>
    %30 = vector.broadcast %29 : vector<1x384xf32> to vector<16x384xf32>
    %31 = arith.addf %28, %30 : vector<16x384xf32>
    %cst_8 = arith.constant 0.000000e+00 : f32
    %32 = vector.broadcast %cst_8 : f32 to vector<16x384xf32>
    %33 = arith.maximumf %31, %32 : vector<16x384xf32>
    %c0_9 = arith.constant 0 : index
    %c0_10 = arith.constant 0 : index
    %34 = vector.load %arg4[%c0_9, %c0_10] : memref<384x128xf32, #tpu.memory_space<vmem>>, vector<384x128xf32>
    %cst_11 = arith.constant dense<0.000000e+00> : vector<16x128xf32>
    %35 = tpu.matmul %33, %34, %cst_11 {dimension_numbers = #tpu.dot_dimension_numbers<[1], [0], [0], [1], [0, 0, 1, 1], [], []>} : vector<16x384xf32>, vector<384x128xf32>, vector<16x128xf32> -> vector<16x128xf32>
    %c0_12 = arith.constant 0 : index
    %c0_13 = arith.constant 0 : index
    %36 = vector.load %arg5[%c0_12, %c0_13] : memref<1x128xf32, #tpu.memory_space<vmem>>, vector<1x128xf32>
    %37 = vector.broadcast %36 : vector<1x128xf32> to vector<16x128xf32>
    %38 = arith.addf %35, %37 : vector<16x128xf32>
    %c0_14 = arith.constant 0 : index
    %c0_15 = arith.constant 0 : index
    %39 = vector.load %arg8[%c0_14, %c0_15] : memref<16x128xf32, #tpu.memory_space<vmem>>, vector<16x128xf32>
    tpu.vector_store %arg8[%c0_14, %c0_15], %38 {strides = array<i32>} : memref<16x128xf32, #tpu.memory_space<vmem>>, vector<16x128xf32>,
    %c0_16 = arith.constant 0 : index
    %c0_17 = arith.constant 0 : index
    %40 = vector.load %arg6[%c0_16, %c0_17] : memref<128x128xf32, #tpu.memory_space<vmem>>, vector<128x128xf32>
    %cst_18 = arith.constant dense<0.000000e+00> : vector<16x128xf32>
    %41 = tpu.matmul %38, %40, %cst_18 {dimension_numbers = #tpu.dot_dimension_numbers<[1], [0], [0], [1], [0, 0, 1, 1], [], []>} : vector<16x128xf32>, vector<128x128xf32>, vector<16x128xf32> -> vector<16x128xf32>
    %c0_19 = arith.constant 0 : index
    %c0_20 = arith.constant 0 : index
    %42 = vector.load %arg7[%c0_19, %c0_20] : memref<1x128xf32, #tpu.memory_space<vmem>>, vector<1x128xf32>
    %43 = vector.broadcast %42 : vector<1x128xf32> to vector<16x128xf32>
    %44 = arith.addf %41, %43 : vector<16x128xf32>
    %c0_21 = arith.constant 0 : index
    %c0_22 = arith.constant 0 : index
    %45 = vector.load %arg9[%c0_21, %c0_22] : memref<16x128xf32, #tpu.memory_space<vmem>>, vector<16x128xf32>
    tpu.vector_store %arg9[%c0_21, %c0_22], %44 {strides = array<i32>} : memref<16x128xf32, #tpu.memory_space<vmem>>, vector<16x128xf32>,
    return
  }
  func.func @transform_0(%arg0: i32) -> (i32, i32) {
    %c0_i32 = arith.constant 0 : i32
    %c0_i32_0 = arith.constant 0 : i32
    return %arg0, %c0_i32 : i32, i32
  }
  func.func @transform_1(%arg0: i32) -> (i32, i32) {
    %c0_i32 = arith.constant 0 : i32
    %c0_i32_0 = arith.constant 0 : i32
    %c0_i32_1 = arith.constant 0 : i32
    return %c0_i32, %c0_i32_0 : i32, i32
  }
  func.func @transform_2(%arg0: i32) -> (i32, i32) {
    %c0_i32 = arith.constant 0 : i32
    %c0_i32_0 = arith.constant 0 : i32
    %c0_i32_1 = arith.constant 0 : i32
    return %c0_i32, %c0_i32_0 : i32, i32
  }
  func.func @transform_3(%arg0: i32) -> (i32, i32) {
    %c0_i32 = arith.constant 0 : i32
    %c0_i32_0 = arith.constant 0 : i32
    %c0_i32_1 = arith.constant 0 : i32
    return %c0_i32, %c0_i32_0 : i32, i32
  }
  func.func @transform_4(%arg0: i32) -> (i32, i32) {
    %c0_i32 = arith.constant 0 : i32
    %c0_i32_0 = arith.constant 0 : i32
    %c0_i32_1 = arith.constant 0 : i32
    return %c0_i32, %c0_i32_0 : i32, i32
  }
  func.func @transform_5(%arg0: i32) -> (i32, i32) {
    %c0_i32 = arith.constant 0 : i32
    %c0_i32_0 = arith.constant 0 : i32
    %c0_i32_1 = arith.constant 0 : i32
    return %c0_i32, %c0_i32_0 : i32, i32
  }
  func.func @transform_6(%arg0: i32) -> (i32, i32) {
    %c0_i32 = arith.constant 0 : i32
    %c0_i32_0 = arith.constant 0 : i32
    %c0_i32_1 = arith.constant 0 : i32
    return %c0_i32, %c0_i32_0 : i32, i32
  }
  func.func @transform_7(%arg0: i32) -> (i32, i32) {
    %c0_i32 = arith.constant 0 : i32
    %c0_i32_0 = arith.constant 0 : i32
    return %arg0, %c0_i32 : i32, i32
  }
  func.func @transform_8(%arg0: i32) -> (i32, i32) {
    %c0_i32 = arith.constant 0 : i32
    %c0_i32_0 = arith.constant 0 : i32
    return %arg0, %c0_i32 : i32, i32
  }
}

</mosaic_0001>

<llo_original>
// kernel: tpu_custom_call.1
$region0: #{tpu_custom_call.1}
  #allocation0 [shape = 'u32[]', space=smem, size = 0x4, offset = 0x4, fixed_abs, tag = 'smem constant byte address 0x4 - core index']
  #allocation1 [shape = 'u32[144,128]{1,0:T(1,128)}', space=vmem, size = 0x12000, scoped, tag = 'internal scratch']
  %s0 = inlined_call_operand.vmem [shape: bf16[256,32], index: 0, kind: input, shape index: {}]
  %s1 = inlined_call_operand.hbm [shape: bf16[32,1536], index: 1, kind: input, shape index: {}]
  %s2 = inlined_call_operand.vmem [shape: f32[1,384], index: 2, kind: input, shape index: {}]
  %s3 = inlined_call_operand.hbm [shape: f32[384,128], index: 3, kind: input, shape index: {}]
  %s4 = inlined_call_operand.vmem [shape: f32[1,128], index: 4, kind: input, shape index: {}]
  %s5 = inlined_call_operand.vmem [shape: f32[128,128], index: 5, kind: input, shape index: {}]
  %s6 = inlined_call_operand.vmem [shape: f32[1,128], index: 6, kind: input, shape index: {}]
  %s7 = inlined_call_operand.hbm [shape: f32[16,128], index: 7, kind: output, shape index: {0}]
  %s8 = inlined_call_operand.hbm [shape: f32[16,128], index: 8, kind: output, shape index: {1}]
  %9 = xla_tuple %s7, %s8
  %s10 = sld [smem:[#allocation0]]
  $region54: #{tpu_custom_call.1} parent=0
    _
  %s12 = ssub.s32 1, %s10
  %s13 = scalar_select 0, %s12, %s10
  $region1: #{tpu_custom_call.1} parent=0
    #allocation2 [shape = 'u8[98304]{0}', space=vmem, size = 0x18000, scoped, tag = 'input window, operand 1, single buffered']
    #allocation3 [shape = 's32[1]{0}', space=sflag, size = 0x4, scoped, tag = 'scoped memory for tpu_custom_call.1']
    #allocation4 [shape = 's32[1]{0}', space=sflag, size = 0x4, scoped, tag = 'scoped memory for tpu_custom_call.1']
    #allocation5 [shape = 'u8[196608]{0}', space=vmem, size = 0x30000, scoped, tag = 'input window, operand 3, single buffered']
    #allocation6 [shape = 's32[1]{0}', space=sflag, size = 0x4, scoped, tag = 'scoped memory for tpu_custom_call.1']
    #allocation7 [shape = 'u8[8192]{0}', space=vmem, size = 0x2000, scoped, tag = 'output window, operand 0, single buffered']
    #allocation8 [shape = 'u8[8192]{0}', space=vmem, size = 0x2000, scoped, tag = 'output window, operand 1, single buffered']
    #allocation9 [shape = 's32[1]{0}', space=sflag, size = 0x4, scoped, tag = 'scoped memory for tpu_custom_call.1']
    %14 = vsyncpa [#allocation3], 0
    %15 = vsyncpa [#allocation6], 0
    %16 = vsyncpa [#allocation4], 0
    %17 = vsyncpa [#allocation9], 0
    // Predicated region
    $region2: #{tpu_custom_call.1} parent=1 // pred_check
      _
    $region3: #{tpu_custom_call.1} parent=1 // pred_check_branch
      %19 = sbr.rel (0) target = $region5
    $region4: #{tpu_custom_call.1} parent=1 // pred_region
      _
    $region5: #{tpu_custom_call.1} parent=1 // pred_fallthru
      _
    // Predicated region
    $region6: #{tpu_custom_call.1} parent=1 // pred_check
      _
    $region7: #{tpu_custom_call.1} parent=1 // pred_check_branch
      %21 = sbr.rel (0) target = $region9
    $region8: #{tpu_custom_call.1} parent=1 // pred_region
      %s23 = ssub.s32 3072, 3072
      %24 = vsyncadd [#allocation3], %s23
      %s25 = sshll.u32 [#allocation2], 4
      %s26 = int_to_ptr.vmem [resolvable:$true] %s25
      %31 = dma.hbm_to_vmem [thread:$0]  %s1, 3072, %s26, [#allocation3], 768, 768, 48
    $region9: #{tpu_custom_call.1} parent=1 // pred_fallthru
      _
    // Predicated region
    $region10: #{tpu_custom_call.1} parent=1 // pred_check
      _
    $region11: #{tpu_custom_call.1} parent=1 // pred_check_branch
      %33 = sbr.rel (0) target = $region13
    $region12: #{tpu_custom_call.1} parent=1 // pred_region
      _
    $region13: #{tpu_custom_call.1} parent=1 // pred_fallthru
      _
    // Predicated region
    $region14: #{tpu_custom_call.1} parent=1 // pred_check
      _
    $region15: #{tpu_custom_call.1} parent=1 // pred_check_branch
      %35 = sbr.rel (0) target = $region17
    $region16: #{tpu_custom_call.1} parent=1 // pred_region
      %s37 = ssub.s32 6144, 6144
      %38 = vsyncadd [#allocation6], %s37
      %s39 = sshll.u32 [#allocation5], 4
      %s40 = int_to_ptr.vmem [resolvable:$true] %s39
      %45 = dma.hbm_to_vmem [thread:$0]  %s3, 6144, %s40, [#allocation6], 128, 128, 8
    $region17: #{tpu_custom_call.1} parent=1 // pred_fallthru
      _
    // Predicated region
    $region18: #{tpu_custom_call.1} parent=1 // pred_check
      _
    $region19: #{tpu_custom_call.1} parent=1 // pred_check_branch
      %47 = sbr.rel (0) target = $region21
    $region20: #{tpu_custom_call.1} parent=1 // pred_region
      _
    $region21: #{tpu_custom_call.1} parent=1 // pred_fallthru
      _
    // Predicated region
    $region22: #{tpu_custom_call.1} parent=1 // pred_check
      _
    $region23: #{tpu_custom_call.1} parent=1 // pred_check_branch
      %49 = sbr.rel (0) target = $region25
    $region24: #{tpu_custom_call.1} parent=1 // pred_region
      _
    $region25: #{tpu_custom_call.1} parent=1 // pred_fallthru
      _
    // Predicated region
    $region26: #{tpu_custom_call.1} parent=1 // pred_check
      _
    $region27: #{tpu_custom_call.1} parent=1 // pred_check_branch
      %51 = sbr.rel (0) target = $region29
    $region28: #{tpu_custom_call.1} parent=1 // pred_region
      _
    $region29: #{tpu_custom_call.1} parent=1 // pred_fallthru
      _
    // Predicated region
    $region30: #{tpu_custom_call.1} parent=1 // pred_check
      _
    $region31: #{tpu_custom_call.1} parent=1 // pred_check_branch
      %53 = sbr.rel (0) target = $region33
    $region32: #{tpu_custom_call.1} parent=1 // pred_region
      %54 = dma.done [#allocation3], 3072
    $region33: #{tpu_custom_call.1} parent=1 // pred_fallthru
      _
    // Predicated region
    $region34: #{tpu_custom_call.1} parent=1 // pred_check
      _
    $region35: #{tpu_custom_call.1} parent=1 // pred_check_branch
      %56 = sbr.rel (0) target = $region37
    $region36: #{tpu_custom_call.1} parent=1 // pred_region
      %57 = dma.done [#allocation6], 6144
    $region37: #{tpu_custom_call.1} parent=1 // pred_fallthru
      _
    %v59 = vld [vmem:[%s0] sm:$0xf]
    %v60 = vld [vmem:[%s0 + $0x4] sm:$0xf]
    %v61 = vld [vmem:[%s0 + $0x8] sm:$0xf]
    %v62 = vld [vmem:[%s0 + $0xc] sm:$0xf]
    %v63 = vld [vmem:[%s0 + $0x10] sm:$0xf]
    %v64 = vld [vmem:[%s0 + $0x14] sm:$0xf]
    %v65 = vld [vmem:[%s0 + $0x18] sm:$0xf]
    %v66 = vld [vmem:[%s0 + $0x1c] sm:$0xf]
    %v67 = vld [vmem:[%s0 + $0x20] sm:$0xf]
    %v68 = vld [vmem:[%s0 + $0x24] sm:$0xf]
    %v69 = vld [vmem:[%s0 + $0x28] sm:$0xf]
    %v70 = vld [vmem:[%s0 + $0x2c] sm:$0xf]
    %v71 = vld [vmem:[%s0 + $0x30] sm:$0xf]
    %v72 = vld [vmem:[%s0 + $0x34] sm:$0xf]
    %v73 = vld [vmem:[%s0 + $0x38] sm:$0xf]
    %v74 = vld [vmem:[%s0 + $0x3c] sm:$0xf]
    %v75 = vld [vmem:[%s0 + $0x40] sm:$0xf]
    %v76 = vld [vmem:[%s0 + $0x44] sm:$0xf]
    %v77 = vld [vmem:[%s0 + $0x48] sm:$0xf]
    %v78 = vld [vmem:[%s0 + $0x4c] sm:$0xf]
    %v79 = vld [vmem:[%s0 + $0x50] sm:$0xf]
    %v80 = vld [vmem:[%s0 + $0x54] sm:$0xf]
    %v81 = vld [vmem:[%s0 + $0x58] sm:$0xf]
    %v82 = vld [vmem:[%s0 + $0x5c] sm:$0xf]
    %v83 = vld [vmem:[%s0 + $0x60] sm:$0xf]
    %v84 = vld [vmem:[%s0 + $0x64] sm:$0xf]
    %v85 = vld [vmem:[%s0 + $0x68] sm:$0xf]
    %v86 = vld [vmem:[%s0 + $0x6c] sm:$0xf]
    %v87 = vld [vmem:[%s0 + $0x70] sm:$0xf]
    %v88 = vld [vmem:[%s0 + $0x74] sm:$0xf]
    %v89 = vld [vmem:[%s0 + $0x78] sm:$0xf]
    %v90 = vld [vmem:[%s0 + $0x7c] sm:$0xf]
    %v91 = vld [vmem:[#allocation2] sm:$0xff]
    %v92 = vld [vmem:[#allocation2 + $0x8] sm:$0xff]
    %v93 = vld [vmem:[#allocation2 + $0x10] sm:$0xff]
    %v94 = vld [vmem:[#allocation2 + $0x18] sm:$0xff]
    %v95 = vld [vmem:[#allocation2 + $0x20] sm:$0xff]
    %v96 = vld [vmem:[#allocation2 + $0x28] sm:$0xff]
    %v97 = vld [vmem:[#allocation2 + $0x30] sm:$0xff]
    %v98 = vld [vmem:[#allocation2 + $0x38] sm:$0xff]
    %v99 = vld [vmem:[#allocation2 + $0x40] sm:$0xff]
    %v100 = vld [vmem:[#allocation2 + $0x48] sm:$0xff]
    %v101 = vld [vmem:[#allocation2 + $0x50] sm:$0xff]
    %v102 = vld [vmem:[#allocation2 + $0x58] sm:$0xff]
    %v103 = vld [vmem:[#allocation2 + $0x60] sm:$0xff]
    %v104 = vld [vmem:[#allocation2 + $0x68] sm:$0xff]
    %v105 = vld [vmem:[#allocation2 + $0x70] sm:$0xff]
    %v106 = vld [vmem:[#allocation2 + $0x78] sm:$0xff]
    %v107 = vld [vmem:[#allocation2 + $0x80] sm:$0xff]
    %v108 = vld [vmem:[#allocation2 + $0x88] sm:$0xff]
    %v109 = vld [vmem:[#allocation2 + $0x90] sm:$0xff]
    %v110 = vld [vmem:[#allocation2 + $0x98] sm:$0xff]
    %v111 = vld [vmem:[#allocation2 + $0xa0] sm:$0xff]
    %v112 = vld [vmem:[#allocation2 + $0xa8] sm:$0xff]
    %v113 = vld [vmem:[#allocation2 + $0xb0] sm:$0xff]
    %v114 = vld [vmem:[#allocation2 + $0xb8] sm:$0xff]
    %v147 = vunpack.c.l.b16 %v59
    %v148 = vunpack.c.l.b16 %v60
    %v149 = vunpack.c.l.b16 %v61
    %v150 = vunpack.c.l.b16 %v62
    %v151 = vunpack.c.l.b16 %v63
    %v152 = vunpack.c.l.b16 %v64
    %v153 = vunpack.c.l.b16 %v65
    %v154 = vunpack.c.l.b16 %v66
    %v155 = vunpack.c.l.b16 %v67
    %v156 = vunpack.c.l.b16 %v68
    %v157 = vunpack.c.l.b16 %v69
    %v158 = vunpack.c.l.b16 %v70
    %v159 = vunpack.c.l.b16 %v71
    %v160 = vunpack.c.l.b16 %v72
    %v161 = vunpack.c.l.b16 %v73
    %v162 = vunpack.c.l.b16 %v74
    %v163 = vunpack.c.l.b16 %v75
    %v164 = vunpack.c.l.b16 %v76
    %v165 = vunpack.c.l.b16 %v77
    %v166 = vunpack.c.l.b16 %v78
    %v167 = vunpack.c.l.b16 %v79
    %v168 = vunpack.c.l.b16 %v80
    %v169 = vunpack.c.l.b16 %v81
    %v170 = vunpack.c.l.b16 %v82
    %v171 = vunpack.c.l.b16 %v83
    %v172 = vunpack.c.l.b16 %v84
    %v173 = vunpack.c.l.b16 %v85
    %v174 = vunpack.c.l.b16 %v86
    %v175 = vunpack.c.l.b16 %v87
    %v176 = vunpack.c.l.b16 %v88
    %v177 = vunpack.c.l.b16 %v89
    %v178 = vunpack.c.l.b16 %v90
    %v179 = vpack.c.b16 %v148, %v147
    %v180 = vpack.c.b16 %v150, %v149
    %v181 = vpack.c.b16 %v152, %v151
    %v182 = vpack.c.b16 %v154, %v153
    %v183 = vpack.c.b16 %v156, %v155
    %v184 = vpack.c.b16 %v158, %v157
    %v185 = vpack.c.b16 %v160, %v159
    %v186 = vpack.c.b16 %v162, %v161
    %v187 = vpack.c.b16 %v164, %v163
    %v188 = vpack.c.b16 %v166, %v165
    %v189 = vpack.c.b16 %v168, %v167
    %v190 = vpack.c.b16 %v170, %v169
    %v191 = vpack.c.b16 %v172, %v171
    %v192 = vpack.c.b16 %v174, %v173
    %v193 = vpack.c.b16 %v176, %v175
    %v194 = vpack.c.b16 %v178, %v177
    %v219 = vunpack.c.l.b16 %v91
    %v220 = vunpack.c.h.b16 %v91
    %v221 = vunpack.c.l.b16 %v92
    %v222 = vunpack.c.h.b16 %v92
    %v223 = vunpack.c.l.b16 %v93
    %v224 = vunpack.c.h.b16 %v93
    %v225 = vunpack.c.l.b16 %v94
    %v226 = vunpack.c.h.b16 %v94
    %v227 = vunpack.c.l.b16 %v95
    %v228 = vunpack.c.h.b16 %v95
    %v229 = vunpack.c.l.b16 %v96
    %v230 = vunpack.c.h.b16 %v96
    %v231 = vunpack.c.l.b16 %v97
    %v232 = vunpack.c.h.b16 %v97
    %v233 = vunpack.c.l.b16 %v98
    %v234 = vunpack.c.h.b16 %v98
    %v235 = vunpack.c.l.b16 %v99
    %v236 = vunpack.c.h.b16 %v99
    %v237 = vunpack.c.l.b16 %v100
    %v238 = vunpack.c.h.b16 %v100
    %v239 = vunpack.c.l.b16 %v101
    %v240 = vunpack.c.h.b16 %v101
    %v241 = vunpack.c.l.b16 %v102
    %v242 = vunpack.c.h.b16 %v102
    %v243 = vunpack.c.l.b16 %v103
    %v244 = vunpack.c.h.b16 %v103
    %v245 = vunpack.c.l.b16 %v104
    %v246 = vunpack.c.h.b16 %v104
    %v247 = vunpack.c.l.b16 %v105
    %v248 = vunpack.c.h.b16 %v105
    %v249 = vunpack.c.l.b16 %v106
    %v250 = vunpack.c.h.b16 %v106
    %v251 = vunpack.c.l.b16 %v107
    %v252 = vunpack.c.h.b16 %v107
    %v253 = vunpack.c.l.b16 %v108
    %v254 = vunpack.c.h.b16 %v108
    %v255 = vunpack.c.l.b16 %v109
    %v256 = vunpack.c.h.b16 %v109
    %v257 = vunpack.c.l.b16 %v110
    %v258 = vunpack.c.h.b16 %v110
    %v259 = vunpack.c.l.b16 %v111
    %v260 = vunpack.c.h.b16 %v111
    %v261 = vunpack.c.l.b16 %v112
    %v262 = vunpack.c.h.b16 %v112
    %v263 = vunpack.c.l.b16 %v113
    %v264 = vunpack.c.h.b16 %v113
    %v265 = vunpack.c.l.b16 %v114
    %v266 = vunpack.c.h.b16 %v114
    %v267 = vpack.c.b16 %v231, %v219
    %v268 = vpack.c.b16 %v232, %v220
    %v269 = vpack.c.b16 %v233, %v221
    %v270 = vpack.c.b16 %v234, %v222
    %v271 = vpack.c.b16 %v235, %v223
    %v272 = vpack.c.b16 %v236, %v224
    %v273 = vpack.c.b16 %v237, %v225
    %v274 = vpack.c.b16 %v238, %v226
    %v275 = vpack.c.b16 %v239, %v227
    %v276 = vpack.c.b16 %v240, %v228
    %v277 = vpack.c.b16 %v241, %v229
    %v278 = vpack.c.b16 %v242, %v230
    %v279 = vpack.c.b16 %v255, %v243
    %v280 = vpack.c.b16 %v256, %v244
    %v281 = vpack.c.b16 %v257, %v245
    %v282 = vpack.c.b16 %v258, %v246
    %v283 = vpack.c.b16 %v259, %v247
    %v284 = vpack.c.b16 %v260, %v248
    %v285 = vpack.c.b16 %v261, %v249
    %v286 = vpack.c.b16 %v262, %v250
    %v287 = vpack.c.b16 %v263, %v251
    %v288 = vpack.c.b16 %v264, %v252
    %v289 = vpack.c.b16 %v265, %v253
    %v290 = vpack.c.b16 %v266, %v254
    %vm315 = vcmask 261120
    %v317 = vsel %vm315, %v179, 0
    %v320 = vsel %vm315, %v180, 0
    %v323 = vsel %vm315, %v181, 0
    %v326 = vsel %vm315, %v182, 0
    %v329 = vsel %vm315, %v183, 0
    %v332 = vsel %vm315, %v184, 0
    %v335 = vsel %vm315, %v185, 0
    %v338 = vsel %vm315, %v186, 0
    %v341 = vsel %vm315, %v187, 0
    %v344 = vsel %vm315, %v188, 0
    %v347 = vsel %vm315, %v189, 0
    %v350 = vsel %vm315, %v190, 0
    %v353 = vsel %vm315, %v191, 0
    %v356 = vsel %vm315, %v192, 0
    %v359 = vsel %vm315, %v193, 0
    %v362 = vsel %vm315, %v194, 0
    %364 = vmatprep.subr.bf16.mxu0 0
    %365 = vmatpush1.bf16.msra.mxu0 0
    %366 = vmatprep.subr.bf16.mxu0 0
    %367 = vmatpush1.bf16.msra.mxu0 0
    %368 = vmatprep.subr.bf16.mxu0 0
    %369 = vmatpush1.bf16.msra.mxu0 0
    %370 = vmatprep.subr.bf16.mxu0 0
    %371 = vmatpush1.bf16.msra.mxu0 0
    %372 = vmatprep.subr.bf16.mxu0 0
    %373 = vmatpush1.bf16.msra.mxu0 0
    %374 = vmatprep.subr.bf16.mxu0 0
    %375 = vmatpush1.bf16.msra.mxu0 0
    %376 = vmatprep.subr.bf16.mxu0 %v280
    %377 = vmatpush1.bf16.msra.mxu0 %v279
    %378 = vmatprep.subr.bf16.mxu0 %v268
    %379 = vmatpush1.bf16.msra.mxu0 %v267
    %380 = vmatprep.subr.bf16.mxu0 0
    %381 = vmatpush2.bf16.msra.mxu0 0
    %382 = vmatprep.subr.bf16.mxu0 0
    %383 = vmatpush2.bf16.msra.mxu0 0
    %384 = vmatprep.subr.bf16.mxu0 0
    %385 = vmatpush2.bf16.msra.mxu0 0
    %386 = vmatprep.subr.bf16.mxu0 0
    %387 = vmatpush2.bf16.msra.mxu0 0
    %388 = vmatprep.subr.bf16.mxu0 0
    %389 = vmatpush2.bf16.msra.mxu0 0
    %390 = vmatprep.subr.bf16.mxu0 0
    %391 = vmatpush2.bf16.msra.mxu0 0
    %392 = vmatprep.subr.bf16.mxu0 0
    %393 = vmatpush2.bf16.msra.mxu0 0
    %394 = vmatprep.subr.bf16.mxu0 0
    %395 = vmatpush2.bf16.msra.mxu0 0
    %396 = vmatprep.mubr.bf16.mxu0 0
    %397 = vmatmul.mubr.bf16.gmra.mxu0 %v317
    %v398 = vpop.f32.mrf.mxu0
    %v399 = vadd.f32 0.0, %v398
    %v400 = vpop.f32.mrf.mxu0
    %v401 = vadd.f32 0.0, %v400
    %v402 = vpop.f32.mrf.mxu0
    %v403 = vadd.f32 0.0, %v402
    %v404 = vpop.f32.mrf.mxu0
    %v405 = vadd.f32 0.0, %v404
    %406 = vmatprep.mubr.bf16.mxu0 0
    %407 = vmatmul.mubr.bf16.gmra.mxu0 %v320
    %v408 = vpop.f32.mrf.mxu0
    %v409 = vadd.f32 0.0, %v408
    %v410 = vpop.f32.mrf.mxu0
    %v411 = vadd.f32 0.0, %v410
    %v412 = vpop.f32.mrf.mxu0
    %v413 = vadd.f32 0.0, %v412
    %v414 = vpop.f32.mrf.mxu0
    %v415 = vadd.f32 0.0, %v414
    %416 = vmatprep.mubr.bf16.mxu0 0
    %417 = vmatmul.mubr.bf16.gmra.mxu0 %v323
    %v418 = vpop.f32.mrf.mxu0
    %v419 = vadd.f32 0.0, %v418
    %v420 = vpop.f32.mrf.mxu0
    %v421 = vadd.f32 0.0, %v420
    %v422 = vpop.f32.mrf.mxu0
    %v423 = vadd.f32 0.0, %v422
    %v424 = vpop.f32.mrf.mxu0
    %v425 = vadd.f32 0.0, %v424
    %426 = vmatprep.mubr.bf16.mxu0 0
    %427 = vmatmul.mubr.bf16.gmra.mxu0 %v326
    %v428 = vpop.f32.mrf.mxu0
    %v429 = vadd.f32 0.0, %v428
    %v430 = vpop.f32.mrf.mxu0
    %v431 = vadd.f32 0.0, %v430
    %v432 = vpop.f32.mrf.mxu0
    %v433 = vadd.f32 0.0, %v432
    %v434 = vpop.f32.mrf.mxu0
    %v435 = vadd.f32 0.0, %v434
    %436 = vmatprep.mubr.bf16.mxu0 0
    %437 = vmatmul.mubr.bf16.gmra.mxu0 %v329
    %v438 = vpop.f32.mrf.mxu0
    %v439 = vadd.f32 0.0, %v438
    %v440 = vpop.f32.mrf.mxu0
    %v441 = vadd.f32 0.0, %v440
    %v442 = vpop.f32.mrf.mxu0
    %v443 = vadd.f32 0.0, %v442
    %v444 = vpop.f32.mrf.mxu0
    %v445 = vadd.f32 0.0, %v444
    %446 = vmatprep.mubr.bf16.mxu0 0
    %447 = vmatmul.mubr.bf16.gmra.mxu0 %v332
    %v448 = vpop.f32.mrf.mxu0
    %v449 = vadd.f32 0.0, %v448
    %v450 = vpop.f32.mrf.mxu0
    %v451 = vadd.f32 0.0, %v450
    %v452 = vpop.f32.mrf.mxu0
    %v453 = vadd.f32 0.0, %v452
    %v454 = vpop.f32.mrf.mxu0
    %v455 = vadd.f32 0.0, %v454
    %456 = vmatprep.mubr.bf16.mxu0 0
    %457 = vmatmul.mubr.bf16.gmra.mxu0 %v335
    %v458 = vpop.f32.mrf.mxu0
    %v459 = vadd.f32 0.0, %v458
    %v460 = vpop.f32.mrf.mxu0
    %v461 = vadd.f32 0.0, %v460
    %v462 = vpop.f32.mrf.mxu0
    %v463 = vadd.f32 0.0, %v462
    %v464 = vpop.f32.mrf.mxu0
    %v465 = vadd.f32 0.0, %v464
    %466 = vmatprep.mubr.bf16.mxu0 0
    %467 = vmatmul.mubr.bf16.gmra.mxu0 %v338
    %v468 = vpop.f32.mrf.mxu0
    %v469 = vadd.f32 0.0, %v468
    %v470 = vpop.f32.mrf.mxu0
    %v471 = vadd.f32 0.0, %v470
    %v472 = vpop.f32.mrf.mxu0
    %v473 = vadd.f32 0.0, %v472
    %v474 = vpop.f32.mrf.mxu0
    %v475 = vadd.f32 0.0, %v474
    %476 = vmatprep.mubr.bf16.mxu0 0
    %477 = vmatmul.mubr.bf16.gmra.mxu0 %v341
    %v478 = vpop.f32.mrf.mxu0
    %v479 = vadd.f32 0.0, %v478
    %v480 = vpop.f32.mrf.mxu0
    %v481 = vadd.f32 0.0, %v480
    %v482 = vpop.f32.mrf.mxu0
    %v483 = vadd.f32 0.0, %v482
    %v484 = vpop.f32.mrf.mxu0
    %v485 = vadd.f32 0.0, %v484
    %486 = vmatprep.mubr.bf16.mxu0 0
    %487 = vmatmul.mubr.bf16.gmra.mxu0 %v344
    %v488 = vpop.f32.mrf.mxu0
    %v489 = vadd.f32 0.0, %v488
    %v490 = vpop.f32.mrf.mxu0
    %v491 = vadd.f32 0.0, %v490
    %v492 = vpop.f32.mrf.mxu0
    %v493 = vadd.f32 0.0, %v492
    %v494 = vpop.f32.mrf.mxu0
    %v495 = vadd.f32 0.0, %v494
    %496 = vmatprep.mubr.bf16.mxu0 0
    %497 = vmatmul.mubr.bf16.gmra.mxu0 %v347
    %v498 = vpop.f32.mrf.mxu0
    %v499 = vadd.f32 0.0, %v498
    %v500 = vpop.f32.mrf.mxu0
    %v501 = vadd.f32 0.0, %v500
    %v502 = vpop.f32.mrf.mxu0
    %v503 = vadd.f32 0.0, %v502
    %v504 = vpop.f32.mrf.mxu0
    %v505 = vadd.f32 0.0, %v504
    %506 = vmatprep.mubr.bf16.mxu0 0
    %507 = vmatmul.mubr.bf16.gmra.mxu0 %v350
    %v508 = vpop.f32.mrf.mxu0
    %v509 = vadd.f32 0.0, %v508
    %v510 = vpop.f32.mrf.mxu0
    %v511 = vadd.f32 0.0, %v510
    %v512 = vpop.f32.mrf.mxu0
    %v513 = vadd.f32 0.0, %v512
    %v514 = vpop.f32.mrf.mxu0
    %v515 = vadd.f32 0.0, %v514
    %516 = vmatprep.mubr.bf16.mxu0 0
    %517 = vmatmul.mubr.bf16.gmra.mxu0 %v353
    %v518 = vpop.f32.mrf.mxu0
    %v519 = vadd.f32 0.0, %v518
    %v520 = vpop.f32.mrf.mxu0
    %v521 = vadd.f32 0.0, %v520
    %v522 = vpop.f32.mrf.mxu0
    %v523 = vadd.f32 0.0, %v522
    %v524 = vpop.f32.mrf.mxu0
    %v525 = vadd.f32 0.0, %v524
    %526 = vmatprep.mubr.bf16.mxu0 0
    %527 = vmatmul.mubr.bf16.gmra.mxu0 %v356
    %v528 = vpop.f32.mrf.mxu0
    %v529 = vadd.f32 0.0, %v528
    %v530 = vpop.f32.mrf.mxu0
    %v531 = vadd.f32 0.0, %v530
    %v532 = vpop.f32.mrf.mxu0
    %v533 = vadd.f32 0.0, %v532
    %v534 = vpop.f32.mrf.mxu0
    %v535 = vadd.f32 0.0, %v534
    %536 = vmatprep.mubr.bf16.mxu0 0
    %537 = vmatmul.mubr.bf16.gmra.mxu0 %v359
    %v538 = vpop.f32.mrf.mxu0
    %v539 = vadd.f32 0.0, %v538
    %v540 = vpop.f32.mrf.mxu0
    %v541 = vadd.f32 0.0, %v540
    %v542 = vpop.f32.mrf.mxu0
    %v543 = vadd.f32 0.0, %v542
    %v544 = vpop.f32.mrf.mxu0
    %v545 = vadd.f32 0.0, %v544
    %546 = vmatprep.mubr.bf16.mxu0 0
    %547 = vmatmul.mubr.bf16.gmra.mxu0 %v362
    %v548 = vpop.f32.mrf.mxu0
    %v549 = vadd.f32 0.0, %v548
    %v550 = vpop.f32.mrf.mxu0
    %v551 = vadd.f32 0.0, %v550
    %v552 = vpop.f32.mrf.mxu0
    %v553 = vadd.f32 0.0, %v552
    %v554 = vpop.f32.mrf.mxu0
    %v555 = vadd.f32 0.0, %v554
    %556 = vdwg.mxu0
    %557 = vmatprep.subr.bf16.mxu0 0
    %558 = vmatpush1.bf16.msra.mxu0 0
    %559 = vmatprep.subr.bf16.mxu0 0
    %560 = vmatpush1.bf16.msra.mxu0 0
    %561 = vmatprep.subr.bf16.mxu0 0
    %562 = vmatpush1.bf16.msra.mxu0 0
    %563 = vmatprep.subr.bf16.mxu0 0
    %564 = vmatpush1.bf16.msra.mxu0 0
    %565 = vmatprep.subr.bf16.mxu0 0
    %566 = vmatpush1.bf16.msra.mxu0 0
    %567 = vmatprep.subr.bf16.mxu0 0
    %568 = vmatpush1.bf16.msra.mxu0 0
    %569 = vmatprep.subr.bf16.mxu0 %v282
    %570 = vmatpush1.bf16.msra.mxu0 %v281
    %571 = vmatprep.subr.bf16.mxu0 %v270
    %572 = vmatpush1.bf16.msra.mxu0 %v269
    %573 = vmatprep.subr.bf16.mxu0 0
    %574 = vmatpush2.bf16.msra.mxu0 0
    %575 = vmatprep.subr.bf16.mxu0 0
    %576 = vmatpush2.bf16.msra.mxu0 0
    %577 = vmatprep.subr.bf16.mxu0 0
    %578 = vmatpush2.bf16.msra.mxu0 0
    %579 = vmatprep.subr.bf16.mxu0 0
    %580 = vmatpush2.bf16.msra.mxu0 0
    %581 = vmatprep.subr.bf16.mxu0 0
    %582 = vmatpush2.bf16.msra.mxu0 0
    %583 = vmatprep.subr.bf16.mxu0 0
    %584 = vmatpush2.bf16.msra.mxu0 0
    %585 = vmatprep.subr.bf16.mxu0 0
    %586 = vmatpush2.bf16.msra.mxu0 0
    %587 = vmatprep.subr.bf16.mxu0 0
    %588 = vmatpush2.bf16.msra.mxu0 0
    %589 = vmatprep.mubr.bf16.mxu0 0
    %590 = vmatmul.mubr.bf16.gmra.mxu0 %v317
    %v591 = vpop.f32.mrf.mxu0
    %v592 = vadd.f32 0.0, %v591
    %v593 = vpop.f32.mrf.mxu0
    %v594 = vadd.f32 0.0, %v593
    %v595 = vpop.f32.mrf.mxu0
    %v596 = vadd.f32 0.0, %v595
    %v597 = vpop.f32.mrf.mxu0
    %v598 = vadd.f32 0.0, %v597
    %599 = vmatprep.mubr.bf16.mxu0 0
    %600 = vmatmul.mubr.bf16.gmra.mxu0 %v320
    %v601 = vpop.f32.mrf.mxu0
    %v602 = vadd.f32 0.0, %v601
    %v603 = vpop.f32.mrf.mxu0
    %v604 = vadd.f32 0.0, %v603
    %v605 = vpop.f32.mrf.mxu0
    %v606 = vadd.f32 0.0, %v605
    %v607 = vpop.f32.mrf.mxu0
    %v608 = vadd.f32 0.0, %v607
    %609 = vmatprep.mubr.bf16.mxu0 0
    %610 = vmatmul.mubr.bf16.gmra.mxu0 %v323
    %v611 = vpop.f32.mrf.mxu0
    %v612 = vadd.f32 0.0, %v611
    %v613 = vpop.f32.mrf.mxu0
    %v614 = vadd.f32 0.0, %v613
    %v615 = vpop.f32.mrf.mxu0
    %v616 = vadd.f32 0.0, %v615
    %v617 = vpop.f32.mrf.mxu0
    %v618 = vadd.f32 0.0, %v617
    %619 = vmatprep.mubr.bf16.mxu0 0
    %620 = vmatmul.mubr.bf16.gmra.mxu0 %v326
    %v621 = vpop.f32.mrf.mxu0
    %v622 = vadd.f32 0.0, %v621
    %v623 = vpop.f32.mrf.mxu0
    %v624 = vadd.f32 0.0, %v623
    %v625 = vpop.f32.mrf.mxu0
    %v626 = vadd.f32 0.0, %v625
    %v627 = vpop.f32.mrf.mxu0
    %v628 = vadd.f32 0.0, %v627
    %629 = vmatprep.mubr.bf16.mxu0 0
    %630 = vmatmul.mubr.bf16.gmra.mxu0 %v329
    %v631 = vpop.f32.mrf.mxu0
    %v632 = vadd.f32 0.0, %v631
    %v633 = vpop.f32.mrf.mxu0
    %v634 = vadd.f32 0.0, %v633
    %v635 = vpop.f32.mrf.mxu0
    %v636 = vadd.f32 0.0, %v635
    %v637 = vpop.f32.mrf.mxu0
    %v638 = vadd.f32 0.0, %v637
    %639 = vmatprep.mubr.bf16.mxu0 0
    %640 = vmatmul.mubr.bf16.gmra.mxu0 %v332
    %v641 = vpop.f32.mrf.mxu0
    %v642 = vadd.f32 0.0, %v641
    %v643 = vpop.f32.mrf.mxu0
    %v644 = vadd.f32 0.0, %v643
    %v645 = vpop.f32.mrf.mxu0
    %v646 = vadd.f32 0.0, %v645
    %v647 = vpop.f32.mrf.mxu0
    %v648 = vadd.f32 0.0, %v647
    %649 = vmatprep.mubr.bf16.mxu0 0
    %650 = vmatmul.mubr.bf16.gmra.mxu0 %v335
    %v651 = vpop.f32.mrf.mxu0
    %v652 = vadd.f32 0.0, %v651
    %v653 = vpop.f32.mrf.mxu0
    %v654 = vadd.f32 0.0, %v653
    %v655 = vpop.f32.mrf.mxu0
    %v656 = vadd.f32 0.0, %v655
    %v657 = vpop.f32.mrf.mxu0
    %v658 = vadd.f32 0.0, %v657
    %659 = vmatprep.mubr.bf16.mxu0 0
    %660 = vmatmul.mubr.bf16.gmra.mxu0 %v338
    %v661 = vpop.f32.mrf.mxu0
    %v662 = vadd.f32 0.0, %v661
    %v663 = vpop.f32.mrf.mxu0
    %v664 = vadd.f32 0.0, %v663
    %v665 = vpop.f32.mrf.mxu0
    %v666 = vadd.f32 0.0, %v665
    %v667 = vpop.f32.mrf.mxu0
    %v668 = vadd.f32 0.0, %v667
    %669 = vmatprep.mubr.bf16.mxu0 0
    %670 = vmatmul.mubr.bf16.gmra.mxu0 %v341
    %v671 = vpop.f32.mrf.mxu0
    %v672 = vadd.f32 0.0, %v671
    %v673 = vpop.f32.mrf.mxu0
    %v674 = vadd.f32 0.0, %v673
    %v675 = vpop.f32.mrf.mxu0
    %v676 = vadd.f32 0.0, %v675
    %v677 = vpop.f32.mrf.mxu0
    %v678 = vadd.f32 0.0, %v677
    %679 = vmatprep.mubr.bf16.mxu0 0
    %680 = vmatmul.mubr.bf16.gmra.mxu0 %v344
    %v681 = vpop.f32.mrf.mxu0
    %v682 = vadd.f32 0.0, %v681
    %v683 = vpop.f32.mrf.mxu0
    %v684 = vadd.f32 0.0, %v683
    %v685 = vpop.f32.mrf.mxu0
    %v686 = vadd.f32 0.0, %v685
    %v687 = vpop.f32.mrf.mxu0
    %v688 = vadd.f32 0.0, %v687
    %689 = vmatprep.mubr.bf16.mxu0 0
    %690 = vmatmul.mubr.bf16.gmra.mxu0 %v347
    %v691 = vpop.f32.mrf.mxu0
    %v692 = vadd.f32 0.0, %v691
    %v693 = vpop.f32.mrf.mxu0
    %v694 = vadd.f32 0.0, %v693
    %v695 = vpop.f32.mrf.mxu0
    %v696 = vadd.f32 0.0, %v695
    %v697 = vpop.f32.mrf.mxu0
    %v698 = vadd.f32 0.0, %v697
    %699 = vmatprep.mubr.bf16.mxu0 0
    %700 = vmatmul.mubr.bf16.gmra.mxu0 %v350
    %v701 = vpop.f32.mrf.mxu0
    %v702 = vadd.f32 0.0, %v701
    %v703 = vpop.f32.mrf.mxu0
    %v704 = vadd.f32 0.0, %v703
    %v705 = vpop.f32.mrf.mxu0
    %v706 = vadd.f32 0.0, %v705
    %v707 = vpop.f32.mrf.mxu0
    %v708 = vadd.f32 0.0, %v707
    %709 = vmatprep.mubr.bf16.mxu0 0
    %710 = vmatmul.mubr.bf16.gmra.mxu0 %v353
    %v711 = vpop.f32.mrf.mxu0
    %v712 = vadd.f32 0.0, %v711
    %v713 = vpop.f32.mrf.mxu0
    %v714 = vadd.f32 0.0, %v713
    %v715 = vpop.f32.mrf.mxu0
    %v716 = vadd.f32 0.0, %v715
    %v717 = vpop.f32.mrf.mxu0
    %v718 = vadd.f32 0.0, %v717
    %719 = vmatprep.mubr.bf16.mxu0 0
    %720 = vmatmul.mubr.bf16.gmra.mxu0 %v356
    %v721 = vpop.f32.mrf.mxu0
    %v722 = vadd.f32 0.0, %v721
    %v723 = vpop.f32.mrf.mxu0
    %v724 = vadd.f32 0.0, %v723
    %v725 = vpop.f32.mrf.mxu0
    %v726 = vadd.f32 0.0, %v725
    %v727 = vpop.f32.mrf.mxu0
    %v728 = vadd.f32 0.0, %v727
    %729 = vmatprep.mubr.bf16.mxu0 0
    %730 = vmatmul.mubr.bf16.gmra.mxu0 %v359
    %v731 = vpop.f32.mrf.mxu0
    %v732 = vadd.f32 0.0, %v731
    %v733 = vpop.f32.mrf.mxu0
    %v734 = vadd.f32 0.0, %v733
    %v735 = vpop.f32.mrf.mxu0
    %v736 = vadd.f32 0.0, %v735
    %v737 = vpop.f32.mrf.mxu0
    %v738 = vadd.f32 0.0, %v737
    %739 = vmatprep.mubr.bf16.mxu0 0
    %740 = vmatmul.mubr.bf16.gmra.mxu0 %v362
    %v741 = vpop.f32.mrf.mxu0
    %v742 = vadd.f32 0.0, %v741
    %v743 = vpop.f32.mrf.mxu0
    %v744 = vadd.f32 0.0, %v743
    %v745 = vpop.f32.mrf.mxu0
    %v746 = vadd.f32 0.0, %v745
    %v747 = vpop.f32.mrf.mxu0
    %v748 = vadd.f32 0.0, %v747
    %749 = vdwg.mxu0
    %750 = vmatprep.subr.bf16.mxu0 0
    %751 = vmatpush1.bf16.msra.mxu0 0
    %752 = vmatprep.subr.bf16.mxu0 0
    %753 = vmatpush1.bf16.msra.mxu0 0
    %754 = vmatprep.subr.bf16.mxu0 0
    %755 = vmatpush1.bf16.msra.mxu0 0
    %756 = vmatprep.subr.bf16.mxu0 0
    %757 = vmatpush1.bf16.msra.mxu0 0
    %758 = vmatprep.subr.bf16.mxu0 0
    %759 = vmatpush1.bf16.msra.mxu0 0
    %760 = vmatprep.subr.bf16.mxu0 0
    %761 = vmatpush1.bf16.msra.mxu0 0
    %762 = vmatprep.subr.bf16.mxu0 %v284
    %763 = vmatpush1.bf16.msra.mxu0 %v283
    %764 = vmatprep.subr.bf16.mxu0 %v272
    %765 = vmatpush1.bf16.msra.mxu0 %v271
    %766 = vmatprep.subr.bf16.mxu0 0
    %767 = vmatpush2.bf16.msra.mxu0 0
    %768 = vmatprep.subr.bf16.mxu0 0
    %769 = vmatpush2.bf16.msra.mxu0 0
    %770 = vmatprep.subr.bf16.mxu0 0
    %771 = vmatpush2.bf16.msra.mxu0 0
    %772 = vmatprep.subr.bf16.mxu0 0
    %773 = vmatpush2.bf16.msra.mxu0 0
    %774 = vmatprep.subr.bf16.mxu0 0
    %775 = vmatpush2.bf16.msra.mxu0 0
    %776 = vmatprep.subr.bf16.mxu0 0
    %777 = vmatpush2.bf16.msra.mxu0 0
    %778 = vmatprep.subr.bf16.mxu0 0
    %779 = vmatpush2.bf16.msra.mxu0 0
    %780 = vmatprep.subr.bf16.mxu0 0
    %781 = vmatpush2.bf16.msra.mxu0 0
    %782 = vmatprep.mubr.bf16.mxu0 0
    %783 = vmatmul.mubr.bf16.gmra.mxu0 %v317
    %v784 = vpop.f32.mrf.mxu0
    %v785 = vadd.f32 0.0, %v784
    %v786 = vpop.f32.mrf.mxu0
    %v787 = vadd.f32 0.0, %v786
    %v788 = vpop.f32.mrf.mxu0
    %v789 = vadd.f32 0.0, %v788
    %v790 = vpop.f32.mrf.mxu0
    %v791 = vadd.f32 0.0, %v790
    %792 = vmatprep.mubr.bf16.mxu0 0
    %793 = vmatmul.mubr.bf16.gmra.mxu0 %v320
    %v794 = vpop.f32.mrf.mxu0
    %v795 = vadd.f32 0.0, %v794
    %v796 = vpop.f32.mrf.mxu0
    %v797 = vadd.f32 0.0, %v796
    %v798 = vpop.f32.mrf.mxu0
    %v799 = vadd.f32 0.0, %v798
    %v800 = vpop.f32.mrf.mxu0
    %v801 = vadd.f32 0.0, %v800
    %802 = vmatprep.mubr.bf16.mxu0 0
    %803 = vmatmul.mubr.bf16.gmra.mxu0 %v323
    %v804 = vpop.f32.mrf.mxu0
    %v805 = vadd.f32 0.0, %v804
    %v806 = vpop.f32.mrf.mxu0
    %v807 = vadd.f32 0.0, %v806
    %v808 = vpop.f32.mrf.mxu0
    %v809 = vadd.f32 0.0, %v808
    %v810 = vpop.f32.mrf.mxu0
    %v811 = vadd.f32 0.0, %v810
    %812 = vmatprep.mubr.bf16.mxu0 0
    %813 = vmatmul.mubr.bf16.gmra.mxu0 %v326
    %v814 = vpop.f32.mrf.mxu0
    %v815 = vadd.f32 0.0, %v814
    %v816 = vpop.f32.mrf.mxu0
    %v817 = vadd.f32 0.0, %v816
    %v818 = vpop.f32.mrf.mxu0
    %v819 = vadd.f32 0.0, %v818
    %v820 = vpop.f32.mrf.mxu0
    %v821 = vadd.f32 0.0, %v820
    %822 = vmatprep.mubr.bf16.mxu0 0
    %823 = vmatmul.mubr.bf16.gmra.mxu0 %v329
    %v824 = vpop.f32.mrf.mxu0
    %v825 = vadd.f32 0.0, %v824
    %v826 = vpop.f32.mrf.mxu0
    %v827 = vadd.f32 0.0, %v826
    %v828 = vpop.f32.mrf.mxu0
    %v829 = vadd.f32 0.0, %v828
    %v830 = vpop.f32.mrf.mxu0
    %v831 = vadd.f32 0.0, %v830
    %832 = vmatprep.mubr.bf16.mxu0 0
    %833 = vmatmul.mubr.bf16.gmra.mxu0 %v332
    %v834 = vpop.f32.mrf.mxu0
    %v835 = vadd.f32 0.0, %v834
    %v836 = vpop.f32.mrf.mxu0
    %v837 = vadd.f32 0.0, %v836
    %v838 = vpop.f32.mrf.mxu0
    %v839 = vadd.f32 0.0, %v838
    %v840 = vpop.f32.mrf.mxu0
    %v841 = vadd.f32 0.0, %v840
    %842 = vmatprep.mubr.bf16.mxu0 0
    %843 = vmatmul.mubr.bf16.gmra.mxu0 %v335
    %v844 = vpop.f32.mrf.mxu0
    %v845 = vadd.f32 0.0, %v844
    %v846 = vpop.f32.mrf.mxu0
    %v847 = vadd.f32 0.0, %v846
    %v848 = vpop.f32.mrf.mxu0
    %v849 = vadd.f32 0.0, %v848
    %v850 = vpop.f32.mrf.mxu0
    %v851 = vadd.f32 0.0, %v850
    %852 = vmatprep.mubr.bf16.mxu0 0
    %853 = vmatmul.mubr.bf16.gmra.mxu0 %v338
    %v854 = vpop.f32.mrf.mxu0
    %v855 = vadd.f32 0.0, %v854
    %v856 = vpop.f32.mrf.mxu0
    %v857 = vadd.f32 0.0, %v856
    %v858 = vpop.f32.mrf.mxu0
    %v859 = vadd.f32 0.0, %v858
    %v860 = vpop.f32.mrf.mxu0
    %v861 = vadd.f32 0.0, %v860
    %862 = vmatprep.mubr.bf16.mxu0 0
    %863 = vmatmul.mubr.bf16.gmra.mxu0 %v341
    %v864 = vpop.f32.mrf.mxu0
    %v865 = vadd.f32 0.0, %v864
    %v866 = vpop.f32.mrf.mxu0
    %v867 = vadd.f32 0.0, %v866
    %v868 = vpop.f32.mrf.mxu0
    %v869 = vadd.f32 0.0, %v868
    %v870 = vpop.f32.mrf.mxu0
    %v871 = vadd.f32 0.0, %v870
    %872 = vmatprep.mubr.bf16.mxu0 0
    %873 = vmatmul.mubr.bf16.gmra.mxu0 %v344
    %v874 = vpop.f32.mrf.mxu0
    %v875 = vadd.f32 0.0, %v874
    %v876 = vpop.f32.mrf.mxu0
    %v877 = vadd.f32 0.0, %v876
    %v878 = vpop.f32.mrf.mxu0
    %v879 = vadd.f32 0.0, %v878
    %v880 = vpop.f32.mrf.mxu0
    %v881 = vadd.f32 0.0, %v880
    %882 = vmatprep.mubr.bf16.mxu0 0
    %883 = vmatmul.mubr.bf16.gmra.mxu0 %v347
    %v884 = vpop.f32.mrf.mxu0
    %v885 = vadd.f32 0.0, %v884
    %v886 = vpop.f32.mrf.mxu0
    %v887 = vadd.f32 0.0, %v886
    %v888 = vpop.f32.mrf.mxu0
    %v889 = vadd.f32 0.0, %v888
    %v890 = vpop.f32.mrf.mxu0
    %v891 = vadd.f32 0.0, %v890
    %892 = vmatprep.mubr.bf16.mxu0 0
    %893 = vmatmul.mubr.bf16.gmra.mxu0 %v350
    %v894 = vpop.f32.mrf.mxu0
    %v895 = vadd.f32 0.0, %v894
    %v896 = vpop.f32.mrf.mxu0
    %v897 = vadd.f32 0.0, %v896
    %v898 = vpop.f32.mrf.mxu0
    %v899 = vadd.f32 0.0, %v898
    %v900 = vpop.f32.mrf.mxu0
    %v901 = vadd.f32 0.0, %v900
    %902 = vmatprep.mubr.bf16.mxu0 0
    %903 = vmatmul.mubr.bf16.gmra.mxu0 %v353
    %v904 = vpop.f32.mrf.mxu0
    %v905 = vadd.f32 0.0, %v904
    %v906 = vpop.f32.mrf.mxu0
    %v907 = vadd.f32 0.0, %v906
    %v908 = vpop.f32.mrf.mxu0
    %v909 = vadd.f32 0.0, %v908
    %v910 = vpop.f32.mrf.mxu0
    %v911 = vadd.f32 0.0, %v910
    %912 = vmatprep.mubr.bf16.mxu0 0
    %913 = vmatmul.mubr.bf16.gmra.mxu0 %v356
    %v914 = vpop.f32.mrf.mxu0
    %v915 = vadd.f32 0.0, %v914
    %v916 = vpop.f32.mrf.mxu0
    %v917 = vadd.f32 0.0, %v916
    %v918 = vpop.f32.mrf.mxu0
    %v919 = vadd.f32 0.0, %v918
    %v920 = vpop.f32.mrf.mxu0
    %v921 = vadd.f32 0.0, %v920
    %922 = vmatprep.mubr.bf16.mxu0 0
    %923 = vmatmul.mubr.bf16.gmra.mxu0 %v359
    %v924 = vpop.f32.mrf.mxu0
    %v925 = vadd.f32 0.0, %v924
    %v926 = vpop.f32.mrf.mxu0
    %v927 = vadd.f32 0.0, %v926
    %v928 = vpop.f32.mrf.mxu0
    %v929 = vadd.f32 0.0, %v928
    %v930 = vpop.f32.mrf.mxu0
    %v931 = vadd.f32 0.0, %v930
    %932 = vmatprep.mubr.bf16.mxu0 0
    %933 = vmatmul.mubr.bf16.gmra.mxu0 %v362
    %v934 = vpop.f32.mrf.mxu0
    %v935 = vadd.f32 0.0, %v934
    %v936 = vpop.f32.mrf.mxu0
    %v937 = vadd.f32 0.0, %v936
    %v938 = vpop.f32.mrf.mxu0
    %v939 = vadd.f32 0.0, %v938
    %v940 = vpop.f32.mrf.mxu0
    %v941 = vadd.f32 0.0, %v940
    %942 = vdwg.mxu0
    %943 = vmatprep.subr.bf16.mxu0 0
    %944 = vmatpush1.bf16.msra.mxu0 0
    %945 = vmatprep.subr.bf16.mxu0 0
    %946 = vmatpush1.bf16.msra.mxu0 0
    %947 = vmatprep.subr.bf16.mxu0 0
    %948 = vmatpush1.bf16.msra.mxu0 0
    %949 = vmatprep.subr.bf16.mxu0 0
    %950 = vmatpush1.bf16.msra.mxu0 0
    %951 = vmatprep.subr.bf16.mxu0 0
    %952 = vmatpush1.bf16.msra.mxu0 0
    %953 = vmatprep.subr.bf16.mxu0 0
    %954 = vmatpush1.bf16.msra.mxu0 0
    %955 = vmatprep.subr.bf16.mxu0 %v286
    %956 = vmatpush1.bf16.msra.mxu0 %v285
    %957 = vmatprep.subr.bf16.mxu0 %v274
    %958 = vmatpush1.bf16.msra.mxu0 %v273
    %959 = vmatprep.subr.bf16.mxu0 0
    %960 = vmatpush2.bf16.msra.mxu0 0
    %961 = vmatprep.subr.bf16.mxu0 0
    %962 = vmatpush2.bf16.msra.mxu0 0
    %963 = vmatprep.subr.bf16.mxu0 0
    %964 = vmatpush2.bf16.msra.mxu0 0
    %965 = vmatprep.subr.bf16.mxu0 0
    %966 = vmatpush2.bf16.msra.mxu0 0
    %967 = vmatprep.subr.bf16.mxu0 0
    %968 = vmatpush2.bf16.msra.mxu0 0
    %969 = vmatprep.subr.bf16.mxu0 0
    %970 = vmatpush2.bf16.msra.mxu0 0
    %971 = vmatprep.subr.bf16.mxu0 0
    %972 = vmatpush2.bf16.msra.mxu0 0
    %973 = vmatprep.subr.bf16.mxu0 0
    %974 = vmatpush2.bf16.msra.mxu0 0
    %975 = vmatprep.mubr.bf16.mxu0 0
    %976 = vmatmul.mubr.bf16.gmra.mxu0 %v317
    %v977 = vpop.f32.mrf.mxu0
    %v978 = vadd.f32 0.0, %v977
    %v979 = vpop.f32.mrf.mxu0
    %v980 = vadd.f32 0.0, %v979
    %v981 = vpop.f32.mrf.mxu0
    %v982 = vadd.f32 0.0, %v981
    %v983 = vpop.f32.mrf.mxu0
    %v984 = vadd.f32 0.0, %v983
    %985 = vmatprep.mubr.bf16.mxu0 0
    %986 = vmatmul.mubr.bf16.gmra.mxu0 %v320
    %v987 = vpop.f32.mrf.mxu0
    %v988 = vadd.f32 0.0, %v987
    %v989 = vpop.f32.mrf.mxu0
    %v990 = vadd.f32 0.0, %v989
    %v991 = vpop.f32.mrf.mxu0
    %v992 = vadd.f32 0.0, %v991
    %v993 = vpop.f32.mrf.mxu0
    %v994 = vadd.f32 0.0, %v993
    %995 = vmatprep.mubr.bf16.mxu0 0
    %996 = vmatmul.mubr.bf16.gmra.mxu0 %v323
    %v997 = vpop.f32.mrf.mxu0
    %v998 = vadd.f32 0.0, %v997
    %v999 = vpop.f32.mrf.mxu0
    %v1000 = vadd.f32 0.0, %v999
    %v1001 = vpop.f32.mrf.mxu0
    %v1002 = vadd.f32 0.0, %v1001
    %v1003 = vpop.f32.mrf.mxu0
    %v1004 = vadd.f32 0.0, %v1003
    %1005 = vmatprep.mubr.bf16.mxu0 0
    %1006 = vmatmul.mubr.bf16.gmra.mxu0 %v326
    %v1007 = vpop.f32.mrf.mxu0
    %v1008 = vadd.f32 0.0, %v1007
    %v1009 = vpop.f32.mrf.mxu0
    %v1010 = vadd.f32 0.0, %v1009
    %v1011 = vpop.f32.mrf.mxu0
    %v1012 = vadd.f32 0.0, %v1011
    %v1013 = vpop.f32.mrf.mxu0
    %v1014 = vadd.f32 0.0, %v1013
    %1015 = vmatprep.mubr.bf16.mxu0 0
    %1016 = vmatmul.mubr.bf16.gmra.mxu0 %v329
    %v1017 = vpop.f32.mrf.mxu0
    %v1018 = vadd.f32 0.0, %v1017
    %v1019 = vpop.f32.mrf.mxu0
    %v1020 = vadd.f32 0.0, %v1019
    %v1021 = vpop.f32.mrf.mxu0
    %v1022 = vadd.f32 0.0, %v1021
    %v1023 = vpop.f32.mrf.mxu0
    %v1024 = vadd.f32 0.0, %v1023
    %1025 = vmatprep.mubr.bf16.mxu0 0
    %1026 = vmatmul.mubr.bf16.gmra.mxu0 %v332
    %v1027 = vpop.f32.mrf.mxu0
    %v1028 = vadd.f32 0.0, %v1027
    %v1029 = vpop.f32.mrf.mxu0
    %v1030 = vadd.f32 0.0, %v1029
    %v1031 = vpop.f32.mrf.mxu0
    %v1032 = vadd.f32 0.0, %v1031
    %v1033 = vpop.f32.mrf.mxu0
    %v1034 = vadd.f32 0.0, %v1033
    %1035 = vmatprep.mubr.bf16.mxu0 0
    %1036 = vmatmul.mubr.bf16.gmra.mxu0 %v335
    %v1037 = vpop.f32.mrf.mxu0
    %v1038 = vadd.f32 0.0, %v1037
    %v1039 = vpop.f32.mrf.mxu0
    %v1040 = vadd.f32 0.0, %v1039
    %v1041 = vpop.f32.mrf.mxu0
    %v1042 = vadd.f32 0.0, %v1041
    %v1043 = vpop.f32.mrf.mxu0
    %v1044 = vadd.f32 0.0, %v1043
    %1045 = vmatprep.mubr.bf16.mxu0 0
    %1046 = vmatmul.mubr.bf16.gmra.mxu0 %v338
    %v1047 = vpop.f32.mrf.mxu0
    %v1048 = vadd.f32 0.0, %v1047
    %v1049 = vpop.f32.mrf.mxu0
    %v1050 = vadd.f32 0.0, %v1049
    %v1051 = vpop.f32.mrf.mxu0
    %v1052 = vadd.f32 0.0, %v1051
    %v1053 = vpop.f32.mrf.mxu0
    %v1054 = vadd.f32 0.0, %v1053
    %1055 = vmatprep.mubr.bf16.mxu0 0
    %1056 = vmatmul.mubr.bf16.gmra.mxu0 %v341
    %v1057 = vpop.f32.mrf.mxu0
    %v1058 = vadd.f32 0.0, %v1057
    %v1059 = vpop.f32.mrf.mxu0
    %v1060 = vadd.f32 0.0, %v1059
    %v1061 = vpop.f32.mrf.mxu0
    %v1062 = vadd.f32 0.0, %v1061
    %v1063 = vpop.f32.mrf.mxu0
    %v1064 = vadd.f32 0.0, %v1063
    %1065 = vmatprep.mubr.bf16.mxu0 0
    %1066 = vmatmul.mubr.bf16.gmra.mxu0 %v344
    %v1067 = vpop.f32.mrf.mxu0
    %v1068 = vadd.f32 0.0, %v1067
    %v1069 = vpop.f32.mrf.mxu0
    %v1070 = vadd.f32 0.0, %v1069
    %v1071 = vpop.f32.mrf.mxu0
    %v1072 = vadd.f32 0.0, %v1071
    %v1073 = vpop.f32.mrf.mxu0
    %v1074 = vadd.f32 0.0, %v1073
    %1075 = vmatprep.mubr.bf16.mxu0 0
    %1076 = vmatmul.mubr.bf16.gmra.mxu0 %v347
    %v1077 = vpop.f32.mrf.mxu0
    %v1078 = vadd.f32 0.0, %v1077
    %v1079 = vpop.f32.mrf.mxu0
    %v1080 = vadd.f32 0.0, %v1079
    %v1081 = vpop.f32.mrf.mxu0
    %v1082 = vadd.f32 0.0, %v1081
    %v1083 = vpop.f32.mrf.mxu0
    %v1084 = vadd.f32 0.0, %v1083
    %1085 = vmatprep.mubr.bf16.mxu0 0
    %1086 = vmatmul.mubr.bf16.gmra.mxu0 %v350
    %v1087 = vpop.f32.mrf.mxu0
    %v1088 = vadd.f32 0.0, %v1087
    %v1089 = vpop.f32.mrf.mxu0
    %v1090 = vadd.f32 0.0, %v1089
    %v1091 = vpop.f32.mrf.mxu0
    %v1092 = vadd.f32 0.0, %v1091
    %v1093 = vpop.f32.mrf.mxu0
    %v1094 = vadd.f32 0.0, %v1093
    %1095 = vmatprep.mubr.bf16.mxu0 0
    %1096 = vmatmul.mubr.bf16.gmra.mxu0 %v353
    %v1097 = vpop.f32.mrf.mxu0
    %v1098 = vadd.f32 0.0, %v1097
    %v1099 = vpop.f32.mrf.mxu0
    %v1100 = vadd.f32 0.0, %v1099
    %v1101 = vpop.f32.mrf.mxu0
    %v1102 = vadd.f32 0.0, %v1101
    %v1103 = vpop.f32.mrf.mxu0
    %v1104 = vadd.f32 0.0, %v1103
    %1105 = vmatprep.mubr.bf16.mxu0 0
    %1106 = vmatmul.mubr.bf16.gmra.mxu0 %v356
    %v1107 = vpop.f32.mrf.mxu0
    %v1108 = vadd.f32 0.0, %v1107
    %v1109 = vpop.f32.mrf.mxu0
    %v1110 = vadd.f32 0.0, %v1109
    %v1111 = vpop.f32.mrf.mxu0
    %v1112 = vadd.f32 0.0, %v1111
    %v1113 = vpop.f32.mrf.mxu0
    %v1114 = vadd.f32 0.0, %v1113
    %1115 = vmatprep.mubr.bf16.mxu0 0
    %1116 = vmatmul.mubr.bf16.gmra.mxu0 %v359
    %v1117 = vpop.f32.mrf.mxu0
    %v1118 = vadd.f32 0.0, %v1117
    %v1119 = vpop.f32.mrf.mxu0
    %v1120 = vadd.f32 0.0, %v1119
    %v1121 = vpop.f32.mrf.mxu0
    %v1122 = vadd.f32 0.0, %v1121
    %v1123 = vpop.f32.mrf.mxu0
    %v1124 = vadd.f32 0.0, %v1123
    %1125 = vmatprep.mubr.bf16.mxu0 0
    %1126 = vmatmul.mubr.bf16.gmra.mxu0 %v362
    %v1127 = vpop.f32.mrf.mxu0
    %v1128 = vadd.f32 0.0, %v1127
    %v1129 = vpop.f32.mrf.mxu0
    %v1130 = vadd.f32 0.0, %v1129
    %v1131 = vpop.f32.mrf.mxu0
    %v1132 = vadd.f32 0.0, %v1131
    %v1133 = vpop.f32.mrf.mxu0
    %v1134 = vadd.f32 0.0, %v1133
    %1135 = vdwg.mxu0
    %1136 = vmatprep.subr.bf16.mxu0 0
    %1137 = vmatpush1.bf16.msra.mxu0 0
    %1138 = vmatprep.subr.bf16.mxu0 0
    %1139 = vmatpush1.bf16.msra.mxu0 0
    %1140 = vmatprep.subr.bf16.mxu0 0
    %1141 = vmatpush1.bf16.msra.mxu0 0
    %1142 = vmatprep.subr.bf16.mxu0 0
    %1143 = vmatpush1.bf16.msra.mxu0 0
    %1144 = vmatprep.subr.bf16.mxu0 0
    %1145 = vmatpush1.bf16.msra.mxu0 0
    %1146 = vmatprep.subr.bf16.mxu0 0
    %1147 = vmatpush1.bf16.msra.mxu0 0
    %1148 = vmatprep.subr.bf16.mxu0 %v288
    %1149 = vmatpush1.bf16.msra.mxu0 %v287
    %1150 = vmatprep.subr.bf16.mxu0 %v276
    %1151 = vmatpush1.bf16.msra.mxu0 %v275
    %1152 = vmatprep.subr.bf16.mxu0 0
    %1153 = vmatpush2.bf16.msra.mxu0 0
    %1154 = vmatprep.subr.bf16.mxu0 0
    %1155 = vmatpush2.bf16.msra.mxu0 0
    %1156 = vmatprep.subr.bf16.mxu0 0
    %1157 = vmatpush2.bf16.msra.mxu0 0
    %1158 = vmatprep.subr.bf16.mxu0 0
    %1159 = vmatpush2.bf16.msra.mxu0 0
    %1160 = vmatprep.subr.bf16.mxu0 0
    %1161 = vmatpush2.bf16.msra.mxu0 0
    %1162 = vmatprep.subr.bf16.mxu0 0
    %1163 = vmatpush2.bf16.msra.mxu0 0
    %1164 = vmatprep.subr.bf16.mxu0 0
    %1165 = vmatpush2.bf16.msra.mxu0 0
    %1166 = vmatprep.subr.bf16.mxu0 0
    %1167 = vmatpush2.bf16.msra.mxu0 0
    %1168 = vmatprep.mubr.bf16.mxu0 0
    %1169 = vmatmul.mubr.bf16.gmra.mxu0 %v317
    %v1170 = vpop.f32.mrf.mxu0
    %v1171 = vadd.f32 0.0, %v1170
    %v1172 = vpop.f32.mrf.mxu0
    %v1173 = vadd.f32 0.0, %v1172
    %v1174 = vpop.f32.mrf.mxu0
    %v1175 = vadd.f32 0.0, %v1174
    %v1176 = vpop.f32.mrf.mxu0
    %v1177 = vadd.f32 0.0, %v1176
    %1178 = vmatprep.mubr.bf16.mxu0 0
    %1179 = vmatmul.mubr.bf16.gmra.mxu0 %v320
    %v1180 = vpop.f32.mrf.mxu0
    %v1181 = vadd.f32 0.0, %v1180
    %v1182 = vpop.f32.mrf.mxu0
    %v1183 = vadd.f32 0.0, %v1182
    %v1184 = vpop.f32.mrf.mxu0
    %v1185 = vadd.f32 0.0, %v1184
    %v1186 = vpop.f32.mrf.mxu0
    %v1187 = vadd.f32 0.0, %v1186
    %1188 = vmatprep.mubr.bf16.mxu0 0
    %1189 = vmatmul.mubr.bf16.gmra.mxu0 %v323
    %v1190 = vpop.f32.mrf.mxu0
    %v1191 = vadd.f32 0.0, %v1190
    %v1192 = vpop.f32.mrf.mxu0
    %v1193 = vadd.f32 0.0, %v1192
    %v1194 = vpop.f32.mrf.mxu0
    %v1195 = vadd.f32 0.0, %v1194
    %v1196 = vpop.f32.mrf.mxu0
    %v1197 = vadd.f32 0.0, %v1196
    %1198 = vmatprep.mubr.bf16.mxu0 0
    %1199 = vmatmul.mubr.bf16.gmra.mxu0 %v326
    %v1200 = vpop.f32.mrf.mxu0
    %v1201 = vadd.f32 0.0, %v1200
    %v1202 = vpop.f32.mrf.mxu0
    %v1203 = vadd.f32 0.0, %v1202
    %v1204 = vpop.f32.mrf.mxu0
    %v1205 = vadd.f32 0.0, %v1204
    %v1206 = vpop.f32.mrf.mxu0
    %v1207 = vadd.f32 0.0, %v1206
    %1208 = vmatprep.mubr.bf16.mxu0 0
    %1209 = vmatmul.mubr.bf16.gmra.mxu0 %v329
    %v1210 = vpop.f32.mrf.mxu0
    %v1211 = vadd.f32 0.0, %v1210
    %v1212 = vpop.f32.mrf.mxu0
    %v1213 = vadd.f32 0.0, %v1212
    %v1214 = vpop.f32.mrf.mxu0
    %v1215 = vadd.f32 0.0, %v1214
    %v1216 = vpop.f32.mrf.mxu0
    %v1217 = vadd.f32 0.0, %v1216
    %1218 = vmatprep.mubr.bf16.mxu0 0
    %1219 = vmatmul.mubr.bf16.gmra.mxu0 %v332
    %v1220 = vpop.f32.mrf.mxu0
    %v1221 = vadd.f32 0.0, %v1220
    %v1222 = vpop.f32.mrf.mxu0
    %v1223 = vadd.f32 0.0, %v1222
    %v1224 = vpop.f32.mrf.mxu0
    %v1225 = vadd.f32 0.0, %v1224
    %v1226 = vpop.f32.mrf.mxu0
    %v1227 = vadd.f32 0.0, %v1226
    %1228 = vmatprep.mubr.bf16.mxu0 0
    %1229 = vmatmul.mubr.bf16.gmra.mxu0 %v335
    %v1230 = vpop.f32.mrf.mxu0
    %v1231 = vadd.f32 0.0, %v1230
    %v1232 = vpop.f32.mrf.mxu0
    %v1233 = vadd.f32 0.0, %v1232
    %v1234 = vpop.f32.mrf.mxu0
    %v1235 = vadd.f32 0.0, %v1234
    %v1236 = vpop.f32.mrf.mxu0
    %v1237 = vadd.f32 0.0, %v1236
    %1238 = vmatprep.mubr.bf16.mxu0 0
    %1239 = vmatmul.mubr.bf16.gmra.mxu0 %v338
    %v1240 = vpop.f32.mrf.mxu0
    %v1241 = vadd.f32 0.0, %v1240
    %v1242 = vpop.f32.mrf.mxu0
    %v1243 = vadd.f32 0.0, %v1242
    %v1244 = vpop.f32.mrf.mxu0
    %v1245 = vadd.f32 0.0, %v1244
    %v1246 = vpop.f32.mrf.mxu0
    %v1247 = vadd.f32 0.0, %v1246
    %1248 = vmatprep.mubr.bf16.mxu0 0
    %1249 = vmatmul.mubr.bf16.gmra.mxu0 %v341
    %v1250 = vpop.f32.mrf.mxu0
    %v1251 = vadd.f32 0.0, %v1250
    %v1252 = vpop.f32.mrf.mxu0
    %v1253 = vadd.f32 0.0, %v1252
    %v1254 = vpop.f32.mrf.mxu0
    %v1255 = vadd.f32 0.0, %v1254
    %v1256 = vpop.f32.mrf.mxu0
    %v1257 = vadd.f32 0.0, %v1256
    %1258 = vmatprep.mubr.bf16.mxu0 0
    %1259 = vmatmul.mubr.bf16.gmra.mxu0 %v344
    %v1260 = vpop.f32.mrf.mxu0
    %v1261 = vadd.f32 0.0, %v1260
    %v1262 = vpop.f32.mrf.mxu0
    %v1263 = vadd.f32 0.0, %v1262
    %v1264 = vpop.f32.mrf.mxu0
    %v1265 = vadd.f32 0.0, %v1264
    %v1266 = vpop.f32.mrf.mxu0
    %v1267 = vadd.f32 0.0, %v1266
    %1268 = vmatprep.mubr.bf16.mxu0 0
    %1269 = vmatmul.mubr.bf16.gmra.mxu0 %v347
    %v1270 = vpop.f32.mrf.mxu0
    %v1271 = vadd.f32 0.0, %v1270
    %v1272 = vpop.f32.mrf.mxu0
    %v1273 = vadd.f32 0.0, %v1272
    %v1274 = vpop.f32.mrf.mxu0
    %v1275 = vadd.f32 0.0, %v1274
    %v1276 = vpop.f32.mrf.mxu0
    %v1277 = vadd.f32 0.0, %v1276
    %1278 = vmatprep.mubr.bf16.mxu0 0
    %1279 = vmatmul.mubr.bf16.gmra.mxu0 %v350
    %v1280 = vpop.f32.mrf.mxu0
    %v1281 = vadd.f32 0.0, %v1280
    %v1282 = vpop.f32.mrf.mxu0
    %v1283 = vadd.f32 0.0, %v1282
    %v1284 = vpop.f32.mrf.mxu0
    %v1285 = vadd.f32 0.0, %v1284
    %v1286 = vpop.f32.mrf.mxu0
    %v1287 = vadd.f32 0.0, %v1286
    %1288 = vmatprep.mubr.bf16.mxu0 0
    %1289 = vmatmul.mubr.bf16.gmra.mxu0 %v353
    %v1290 = vpop.f32.mrf.mxu0
    %v1291 = vadd.f32 0.0, %v1290
    %v1292 = vpop.f32.mrf.mxu0
    %v1293 = vadd.f32 0.0, %v1292
    %v1294 = vpop.f32.mrf.mxu0
    %v1295 = vadd.f32 0.0, %v1294
    %v1296 = vpop.f32.mrf.mxu0
    %v1297 = vadd.f32 0.0, %v1296
    %1298 = vmatprep.mubr.bf16.mxu0 0
    %1299 = vmatmul.mubr.bf16.gmra.mxu0 %v356
    %v1300 = vpop.f32.mrf.mxu0
    %v1301 = vadd.f32 0.0, %v1300
    %v1302 = vpop.f32.mrf.mxu0
    %v1303 = vadd.f32 0.0, %v1302
    %v1304 = vpop.f32.mrf.mxu0
    %v1305 = vadd.f32 0.0, %v1304
    %v1306 = vpop.f32.mrf.mxu0
    %v1307 = vadd.f32 0.0, %v1306
    %1308 = vmatprep.mubr.bf16.mxu0 0
    %1309 = vmatmul.mubr.bf16.gmra.mxu0 %v359
    %v1310 = vpop.f32.mrf.mxu0
    %v1311 = vadd.f32 0.0, %v1310
    %v1312 = vpop.f32.mrf.mxu0
    %v1313 = vadd.f32 0.0, %v1312
    %v1314 = vpop.f32.mrf.mxu0
    %v1315 = vadd.f32 0.0, %v1314
    %v1316 = vpop.f32.mrf.mxu0
    %v1317 = vadd.f32 0.0, %v1316
    %1318 = vmatprep.mubr.bf16.mxu0 0
    %1319 = vmatmul.mubr.bf16.gmra.mxu0 %v362
    %v1320 = vpop.f32.mrf.mxu0
    %v1321 = vadd.f32 0.0, %v1320
    %v1322 = vpop.f32.mrf.mxu0
    %v1323 = vadd.f32 0.0, %v1322
    %v1324 = vpop.f32.mrf.mxu0
    %v1325 = vadd.f32 0.0, %v1324
    %v1326 = vpop.f32.mrf.mxu0
    %v1327 = vadd.f32 0.0, %v1326
    %1328 = vdwg.mxu0
    %1329 = vmatprep.subr.bf16.mxu0 0
    %1330 = vmatpush1.bf16.msra.mxu0 0
    %1331 = vmatprep.subr.bf16.mxu0 0
    %1332 = vmatpush1.bf16.msra.mxu0 0
    %1333 = vmatprep.subr.bf16.mxu0 0
    %1334 = vmatpush1.bf16.msra.mxu0 0
    %1335 = vmatprep.subr.bf16.mxu0 0
    %1336 = vmatpush1.bf16.msra.mxu0 0
    %1337 = vmatprep.subr.bf16.mxu0 0
    %1338 = vmatpush1.bf16.msra.mxu0 0
    %1339 = vmatprep.subr.bf16.mxu0 0
    %1340 = vmatpush1.bf16.msra.mxu0 0
    %1341 = vmatprep.subr.bf16.mxu0 %v290
    %1342 = vmatpush1.bf16.msra.mxu0 %v289
    %1343 = vmatprep.subr.bf16.mxu0 %v278
    %1344 = vmatpush1.bf16.msra.mxu0 %v277
    %1345 = vmatprep.subr.bf16.mxu0 0
    %1346 = vmatpush2.bf16.msra.mxu0 0
    %1347 = vmatprep.subr.bf16.mxu0 0
    %1348 = vmatpush2.bf16.msra.mxu0 0
    %1349 = vmatprep.subr.bf16.mxu0 0
    %1350 = vmatpush2.bf16.msra.mxu0 0
    %1351 = vmatprep.subr.bf16.mxu0 0
    %1352 = vmatpush2.bf16.msra.mxu0 0
    %1353 = vmatprep.subr.bf16.mxu0 0
    %1354 = vmatpush2.bf16.msra.mxu0 0
    %1355 = vmatprep.subr.bf16.mxu0 0
    %1356 = vmatpush2.bf16.msra.mxu0 0
    %1357 = vmatprep.subr.bf16.mxu0 0
    %1358 = vmatpush2.bf16.msra.mxu0 0
    %1359 = vmatprep.subr.bf16.mxu0 0
    %1360 = vmatpush2.bf16.msra.mxu0 0
    %1361 = vmatprep.mubr.bf16.mxu0 0
    %1362 = vmatmul.mubr.bf16.gmra.mxu0 %v317
    %v1363 = vpop.f32.mrf.mxu0
    %v1364 = vadd.f32 0.0, %v1363
    %v1365 = vpop.f32.mrf.mxu0
    %v1366 = vadd.f32 0.0, %v1365
    %v1367 = vpop.f32.mrf.mxu0
    %v1368 = vadd.f32 0.0, %v1367
    %v1369 = vpop.f32.mrf.mxu0
    %v1370 = vadd.f32 0.0, %v1369
    %1371 = vmatprep.mubr.bf16.mxu0 0
    %1372 = vmatmul.mubr.bf16.gmra.mxu0 %v320
    %v1373 = vpop.f32.mrf.mxu0
    %v1374 = vadd.f32 0.0, %v1373
    %v1375 = vpop.f32.mrf.mxu0
    %v1376 = vadd.f32 0.0, %v1375
    %v1377 = vpop.f32.mrf.mxu0
    %v1378 = vadd.f32 0.0, %v1377
    %v1379 = vpop.f32.mrf.mxu0
    %v1380 = vadd.f32 0.0, %v1379
    %1381 = vmatprep.mubr.bf16.mxu0 0
    %1382 = vmatmul.mubr.bf16.gmra.mxu0 %v323
    %v1383 = vpop.f32.mrf.mxu0
    %v1384 = vadd.f32 0.0, %v1383
    %v1385 = vpop.f32.mrf.mxu0
    %v1386 = vadd.f32 0.0, %v1385
    %v1387 = vpop.f32.mrf.mxu0
    %v1388 = vadd.f32 0.0, %v1387
    %v1389 = vpop.f32.mrf.mxu0
    %v1390 = vadd.f32 0.0, %v1389
    %1391 = vmatprep.mubr.bf16.mxu0 0
    %1392 = vmatmul.mubr.bf16.gmra.mxu0 %v326
    %v1393 = vpop.f32.mrf.mxu0
    %v1394 = vadd.f32 0.0, %v1393
    %v1395 = vpop.f32.mrf.mxu0
    %v1396 = vadd.f32 0.0, %v1395
    %v1397 = vpop.f32.mrf.mxu0
    %v1398 = vadd.f32 0.0, %v1397
    %v1399 = vpop.f32.mrf.mxu0
    %v1400 = vadd.f32 0.0, %v1399
    %1401 = vmatprep.mubr.bf16.mxu0 0
    %1402 = vmatmul.mubr.bf16.gmra.mxu0 %v329
    %v1403 = vpop.f32.mrf.mxu0
    %v1404 = vadd.f32 0.0, %v1403
    %v1405 = vpop.f32.mrf.mxu0
    %v1406 = vadd.f32 0.0, %v1405
    %v1407 = vpop.f32.mrf.mxu0
    %v1408 = vadd.f32 0.0, %v1407
    %v1409 = vpop.f32.mrf.mxu0
    %v1410 = vadd.f32 0.0, %v1409
    %1411 = vmatprep.mubr.bf16.mxu0 0
    %1412 = vmatmul.mubr.bf16.gmra.mxu0 %v332
    %v1413 = vpop.f32.mrf.mxu0
    %v1414 = vadd.f32 0.0, %v1413
    %v1415 = vpop.f32.mrf.mxu0
    %v1416 = vadd.f32 0.0, %v1415
    %v1417 = vpop.f32.mrf.mxu0
    %v1418 = vadd.f32 0.0, %v1417
    %v1419 = vpop.f32.mrf.mxu0
    %v1420 = vadd.f32 0.0, %v1419
    %1421 = vmatprep.mubr.bf16.mxu0 0
    %1422 = vmatmul.mubr.bf16.gmra.mxu0 %v335
    %v1423 = vpop.f32.mrf.mxu0
    %v1424 = vadd.f32 0.0, %v1423
    %v1425 = vpop.f32.mrf.mxu0
    %v1426 = vadd.f32 0.0, %v1425
    %v1427 = vpop.f32.mrf.mxu0
    %v1428 = vadd.f32 0.0, %v1427
    %v1429 = vpop.f32.mrf.mxu0
    %v1430 = vadd.f32 0.0, %v1429
    %1431 = vmatprep.mubr.bf16.mxu0 0
    %1432 = vmatmul.mubr.bf16.gmra.mxu0 %v338
    %v1433 = vpop.f32.mrf.mxu0
    %v1434 = vadd.f32 0.0, %v1433
    %v1435 = vpop.f32.mrf.mxu0
    %v1436 = vadd.f32 0.0, %v1435
    %v1437 = vpop.f32.mrf.mxu0
    %v1438 = vadd.f32 0.0, %v1437
    %v1439 = vpop.f32.mrf.mxu0
    %v1440 = vadd.f32 0.0, %v1439
    %1441 = vmatprep.mubr.bf16.mxu0 0
    %1442 = vmatmul.mubr.bf16.gmra.mxu0 %v341
    %v1443 = vpop.f32.mrf.mxu0
    %v1444 = vadd.f32 0.0, %v1443
    %v1445 = vpop.f32.mrf.mxu0
    %v1446 = vadd.f32 0.0, %v1445
    %v1447 = vpop.f32.mrf.mxu0
    %v1448 = vadd.f32 0.0, %v1447
    %v1449 = vpop.f32.mrf.mxu0
    %v1450 = vadd.f32 0.0, %v1449
    %1451 = vmatprep.mubr.bf16.mxu0 0
    %1452 = vmatmul.mubr.bf16.gmra.mxu0 %v344
    %v1453 = vpop.f32.mrf.mxu0
    %v1454 = vadd.f32 0.0, %v1453
    %v1455 = vpop.f32.mrf.mxu0
    %v1456 = vadd.f32 0.0, %v1455
    %v1457 = vpop.f32.mrf.mxu0
    %v1458 = vadd.f32 0.0, %v1457
    %v1459 = vpop.f32.mrf.mxu0
    %v1460 = vadd.f32 0.0, %v1459
    %1461 = vmatprep.mubr.bf16.mxu0 0
    %1462 = vmatmul.mubr.bf16.gmra.mxu0 %v347
    %v1463 = vpop.f32.mrf.mxu0
    %v1464 = vadd.f32 0.0, %v1463
    %v1465 = vpop.f32.mrf.mxu0
    %v1466 = vadd.f32 0.0, %v1465
    %v1467 = vpop.f32.mrf.mxu0
    %v1468 = vadd.f32 0.0, %v1467
    %v1469 = vpop.f32.mrf.mxu0
    %v1470 = vadd.f32 0.0, %v1469
    %1471 = vmatprep.mubr.bf16.mxu0 0
    %1472 = vmatmul.mubr.bf16.gmra.mxu0 %v350
    %v1473 = vpop.f32.mrf.mxu0
    %v1474 = vadd.f32 0.0, %v1473
    %v1475 = vpop.f32.mrf.mxu0
    %v1476 = vadd.f32 0.0, %v1475
    %v1477 = vpop.f32.mrf.mxu0
    %v1478 = vadd.f32 0.0, %v1477
    %v1479 = vpop.f32.mrf.mxu0
    %v1480 = vadd.f32 0.0, %v1479
    %1481 = vmatprep.mubr.bf16.mxu0 0
    %1482 = vmatmul.mubr.bf16.gmra.mxu0 %v353
    %v1483 = vpop.f32.mrf.mxu0
    %v1484 = vadd.f32 0.0, %v1483
    %v1485 = vpop.f32.mrf.mxu0
    %v1486 = vadd.f32 0.0, %v1485
    %v1487 = vpop.f32.mrf.mxu0
    %v1488 = vadd.f32 0.0, %v1487
    %v1489 = vpop.f32.mrf.mxu0
    %v1490 = vadd.f32 0.0, %v1489
    %1491 = vmatprep.mubr.bf16.mxu0 0
    %1492 = vmatmul.mubr.bf16.gmra.mxu0 %v356
    %v1493 = vpop.f32.mrf.mxu0
    %v1494 = vadd.f32 0.0, %v1493
    %v1495 = vpop.f32.mrf.mxu0
    %v1496 = vadd.f32 0.0, %v1495
    %v1497 = vpop.f32.mrf.mxu0
    %v1498 = vadd.f32 0.0, %v1497
    %v1499 = vpop.f32.mrf.mxu0
    %v1500 = vadd.f32 0.0, %v1499
    %1501 = vmatprep.mubr.bf16.mxu0 0
    %1502 = vmatmul.mubr.bf16.gmra.mxu0 %v359
    %v1503 = vpop.f32.mrf.mxu0
    %v1504 = vadd.f32 0.0, %v1503
    %v1505 = vpop.f32.mrf.mxu0
    %v1506 = vadd.f32 0.0, %v1505
    %v1507 = vpop.f32.mrf.mxu0
    %v1508 = vadd.f32 0.0, %v1507
    %v1509 = vpop.f32.mrf.mxu0
    %v1510 = vadd.f32 0.0, %v1509
    %1511 = vmatprep.mubr.bf16.mxu0 0
    %1512 = vmatmul.mubr.bf16.gmra.mxu0 %v362
    %v1513 = vpop.f32.mrf.mxu0
    %v1514 = vadd.f32 0.0, %v1513
    %v1515 = vpop.f32.mrf.mxu0
    %v1516 = vadd.f32 0.0, %v1515
    %v1517 = vpop.f32.mrf.mxu0
    %v1518 = vadd.f32 0.0, %v1517
    %v1519 = vpop.f32.mrf.mxu0
    %v1520 = vadd.f32 0.0, %v1519
    %1521 = vdwg.mxu0
    %vm1554 = vcmask 1046528
    %v1555 = vrot.slane %v401, 1
    %v1556 = vrot.slane %v405, 1
    %v1557 = vsel %vm1554, %v1555, %v1556
    %v1558 = vrot.slane %v411, 1
    %v1559 = vrot.slane %v415, 1
    %v1560 = vsel %vm1554, %v1558, %v1559
    %v1561 = vrot.slane %v421, 1
    %v1562 = vrot.slane %v425, 1
    %v1563 = vsel %vm1554, %v1561, %v1562
    %v1564 = vrot.slane %v431, 1
    %v1565 = vrot.slane %v435, 1
    %v1566 = vsel %vm1554, %v1564, %v1565
    %v1567 = vrot.slane %v441, 1
    %v1568 = vrot.slane %v445, 1
    %v1569 = vsel %vm1554, %v1567, %v1568
    %v1570 = vrot.slane %v451, 1
    %v1571 = vrot.slane %v455, 1
    %v1572 = vsel %vm1554, %v1570, %v1571
    %v1573 = vrot.slane %v461, 1
    %v1574 = vrot.slane %v465, 1
    %v1575 = vsel %vm1554, %v1573, %v1574
    %v1576 = vrot.slane %v471, 1
    %v1577 = vrot.slane %v475, 1
    %v1578 = vsel %vm1554, %v1576, %v1577
    %v1579 = vrot.slane %v481, 1
    %v1580 = vrot.slane %v485, 1
    %v1581 = vsel %vm1554, %v1579, %v1580
    %v1582 = vrot.slane %v491, 1
    %v1583 = vrot.slane %v495, 1
    %v1584 = vsel %vm1554, %v1582, %v1583
    %v1585 = vrot.slane %v501, 1
    %v1586 = vrot.slane %v505, 1
    %v1587 = vsel %vm1554, %v1585, %v1586
    %v1588 = vrot.slane %v511, 1
    %v1589 = vrot.slane %v515, 1
    %v1590 = vsel %vm1554, %v1588, %v1589
    %v1591 = vrot.slane %v521, 1
    %v1592 = vrot.slane %v525, 1
    %v1593 = vsel %vm1554, %v1591, %v1592
    %v1594 = vrot.slane %v531, 1
    %v1595 = vrot.slane %v535, 1
    %v1596 = vsel %vm1554, %v1594, %v1595
    %v1597 = vrot.slane %v541, 1
    %v1598 = vrot.slane %v545, 1
    %v1599 = vsel %vm1554, %v1597, %v1598
    %v1600 = vrot.slane %v551, 1
    %v1601 = vrot.slane %v555, 1
    %v1602 = vsel %vm1554, %v1600, %v1601
    %v1635 = vadd.f32 %v399, %v1557
    %v1636 = vadd.f32 %v403, %v1556
    %v1637 = vadd.f32 %v409, %v1560
    %v1638 = vadd.f32 %v413, %v1559
    %v1639 = vadd.f32 %v419, %v1563
    %v1640 = vadd.f32 %v423, %v1562
    %v1641 = vadd.f32 %v429, %v1566
    %v1642 = vadd.f32 %v433, %v1565
    %v1643 = vadd.f32 %v439, %v1569
    %v1644 = vadd.f32 %v443, %v1568
    %v1645 = vadd.f32 %v449, %v1572
    %v1646 = vadd.f32 %v453, %v1571
    %v1647 = vadd.f32 %v459, %v1575
    %v1648 = vadd.f32 %v463, %v1574
    %v1649 = vadd.f32 %v469, %v1578
    %v1650 = vadd.f32 %v473, %v1577
    %v1651 = vadd.f32 %v479, %v1581
    %v1652 = vadd.f32 %v483, %v1580
    %v1653 = vadd.f32 %v489, %v1584
    %v1654 = vadd.f32 %v493, %v1583
    %v1655 = vadd.f32 %v499, %v1587
    %v1656 = vadd.f32 %v503, %v1586
    %v1657 = vadd.f32 %v509, %v1590
    %v1658 = vadd.f32 %v513, %v1589
    %v1659 = vadd.f32 %v519, %v1593
    %v1660 = vadd.f32 %v523, %v1592
    %v1661 = vadd.f32 %v529, %v1596
    %v1662 = vadd.f32 %v533, %v1595
    %v1663 = vadd.f32 %v539, %v1599
    %v1664 = vadd.f32 %v543, %v1598
    %v1665 = vadd.f32 %v549, %v1602
    %v1666 = vadd.f32 %v553, %v1601
    %vm1699 = vcmask 1045504
    %v1700 = vrot.slane %v592, 2
    %v1701 = vrot.slane %v596, 2
    %v1702 = vsel %vm1699, %v1700, %v1701
    %v1703 = vrot.slane %v602, 2
    %v1704 = vrot.slane %v606, 2
    %v1705 = vsel %vm1699, %v1703, %v1704
    %v1706 = vrot.slane %v612, 2
    %v1707 = vrot.slane %v616, 2
    %v1708 = vsel %vm1699, %v1706, %v1707
    %v1709 = vrot.slane %v622, 2
    %v1710 = vrot.slane %v626, 2
    %v1711 = vsel %vm1699, %v1709, %v1710
    %v1712 = vrot.slane %v632, 2
    %v1713 = vrot.slane %v636, 2
    %v1714 = vsel %vm1699, %v1712, %v1713
    %v1715 = vrot.slane %v642, 2
    %v1716 = vrot.slane %v646, 2
    %v1717 = vsel %vm1699, %v1715, %v1716
    %v1718 = vrot.slane %v652, 2
    %v1719 = vrot.slane %v656, 2
    %v1720 = vsel %vm1699, %v1718, %v1719
    %v1721 = vrot.slane %v662, 2
    %v1722 = vrot.slane %v666, 2
    %v1723 = vsel %vm1699, %v1721, %v1722
    %v1724 = vrot.slane %v672, 2
    %v1725 = vrot.slane %v676, 2
    %v1726 = vsel %vm1699, %v1724, %v1725
    %v1727 = vrot.slane %v682, 2
    %v1728 = vrot.slane %v686, 2
    %v1729 = vsel %vm1699, %v1727, %v1728
    %v1730 = vrot.slane %v692, 2
    %v1731 = vrot.slane %v696, 2
    %v1732 = vsel %vm1699, %v1730, %v1731
    %v1733 = vrot.slane %v702, 2
    %v1734 = vrot.slane %v706, 2
    %v1735 = vsel %vm1699, %v1733, %v1734
    %v1736 = vrot.slane %v712, 2
    %v1737 = vrot.slane %v716, 2
    %v1738 = vsel %vm1699, %v1736, %v1737
    %v1739 = vrot.slane %v722, 2
    %v1740 = vrot.slane %v726, 2
    %v1741 = vsel %vm1699, %v1739, %v1740
    %v1742 = vrot.slane %v732, 2
    %v1743 = vrot.slane %v736, 2
    %v1744 = vsel %vm1699, %v1742, %v1743
    %v1745 = vrot.slane %v742, 2
    %v1746 = vrot.slane %v746, 2
    %v1747 = vsel %vm1699, %v1745, %v1746
    %v1780 = vadd.f32 %v1635, %v1702
    %v1781 = vadd.f32 %v1636, %v1701
    %v1782 = vadd.f32 %v1637, %v1705
    %v1783 = vadd.f32 %v1638, %v1704
    %v1784 = vadd.f32 %v1639, %v1708
    %v1785 = vadd.f32 %v1640, %v1707
    %v1786 = vadd.f32 %v1641, %v1711
    %v1787 = vadd.f32 %v1642, %v1710
    %v1788 = vadd.f32 %v1643, %v1714
    %v1789 = vadd.f32 %v1644, %v1713
    %v1790 = vadd.f32 %v1645, %v1717
    %v1791 = vadd.f32 %v1646, %v1716
    %v1792 = vadd.f32 %v1647, %v1720
    %v1793 = vadd.f32 %v1648, %v1719
    %v1794 = vadd.f32 %v1649, %v1723
    %v1795 = vadd.f32 %v1650, %v1722
    %v1796 = vadd.f32 %v1651, %v1726
    %v1797 = vadd.f32 %v1652, %v1725
    %v1798 = vadd.f32 %v1653, %v1729
    %v1799 = vadd.f32 %v1654, %v1728
    %v1800 = vadd.f32 %v1655, %v1732
    %v1801 = vadd.f32 %v1656, %v1731
    %v1802 = vadd.f32 %v1657, %v1735
    %v1803 = vadd.f32 %v1658, %v1734
    %v1804 = vadd.f32 %v1659, %v1738
    %v1805 = vadd.f32 %v1660, %v1737
    %v1806 = vadd.f32 %v1661, %v1741
    %v1807 = vadd.f32 %v1662, %v1740
    %v1808 = vadd.f32 %v1663, %v1744
    %v1809 = vadd.f32 %v1664, %v1743
    %v1810 = vadd.f32 %v1665, %v1747
    %v1811 = vadd.f32 %v1666, %v1746
    %v1812 = vsel %vm1699, %v1781, -inf
    %v1813 = vmax.f32 %v1780, %v1812
    %v1814 = vrot.slane %v1813, 4
    %v1815 = vmax.f32 %v1813, %v1814
    %v1816 = vrot.slane %v1815, 2
    %v1817 = vmax.f32 %v1815, %v1816
    %v1818 = vrot.slane %v1817, 1
    %v1819 = vmax.f32 %v1817, %v1818
    %v1820 = vsel %vm1699, %v1783, -inf
    %v1821 = vmax.f32 %v1782, %v1820
    %v1822 = vrot.slane %v1821, 4
    %v1823 = vmax.f32 %v1821, %v1822
    %v1824 = vrot.slane %v1823, 2
    %v1825 = vmax.f32 %v1823, %v1824
    %v1826 = vrot.slane %v1825, 1
    %v1827 = vmax.f32 %v1825, %v1826
    %v1828 = vsel %vm1699, %v1785, -inf
    %v1829 = vmax.f32 %v1784, %v1828
    %v1830 = vrot.slane %v1829, 4
    %v1831 = vmax.f32 %v1829, %v1830
    %v1832 = vrot.slane %v1831, 2
    %v1833 = vmax.f32 %v1831, %v1832
    %v1834 = vrot.slane %v1833, 1
    %v1835 = vmax.f32 %v1833, %v1834
    %v1836 = vsel %vm1699, %v1787, -inf
    %v1837 = vmax.f32 %v1786, %v1836
    %v1838 = vrot.slane %v1837, 4
    %v1839 = vmax.f32 %v1837, %v1838
    %v1840 = vrot.slane %v1839, 2
    %v1841 = vmax.f32 %v1839, %v1840
    %v1842 = vrot.slane %v1841, 1
    %v1843 = vmax.f32 %v1841, %v1842
    %v1844 = vsel %vm1699, %v1789, -inf
    %v1845 = vmax.f32 %v1788, %v1844
    %v1846 = vrot.slane %v1845, 4
    %v1847 = vmax.f32 %v1845, %v1846
    %v1848 = vrot.slane %v1847, 2
    %v1849 = vmax.f32 %v1847, %v1848
    %v1850 = vrot.slane %v1849, 1
    %v1851 = vmax.f32 %v1849, %v1850
    %v1852 = vsel %vm1699, %v1791, -inf
    %v1853 = vmax.f32 %v1790, %v1852
    %v1854 = vrot.slane %v1853, 4
    %v1855 = vmax.f32 %v1853, %v1854
    %v1856 = vrot.slane %v1855, 2
    %v1857 = vmax.f32 %v1855, %v1856
    %v1858 = vrot.slane %v1857, 1
    %v1859 = vmax.f32 %v1857, %v1858
    %v1860 = vsel %vm1699, %v1793, -inf
    %v1861 = vmax.f32 %v1792, %v1860
    %v1862 = vrot.slane %v1861, 4
    %v1863 = vmax.f32 %v1861, %v1862
    %v1864 = vrot.slane %v1863, 2
    %v1865 = vmax.f32 %v1863, %v1864
    %v1866 = vrot.slane %v1865, 1
    %v1867 = vmax.f32 %v1865, %v1866
    %v1868 = vsel %vm1699, %v1795, -inf
    %v1869 = vmax.f32 %v1794, %v1868
    %v1870 = vrot.slane %v1869, 4
    %v1871 = vmax.f32 %v1869, %v1870
    %v1872 = vrot.slane %v1871, 2
    %v1873 = vmax.f32 %v1871, %v1872
    %v1874 = vrot.slane %v1873, 1
    %v1875 = vmax.f32 %v1873, %v1874
    %v1876 = vsel %vm1699, %v1797, -inf
    %v1877 = vmax.f32 %v1796, %v1876
    %v1878 = vrot.slane %v1877, 4
    %v1879 = vmax.f32 %v1877, %v1878
    %v1880 = vrot.slane %v1879, 2
    %v1881 = vmax.f32 %v1879, %v1880
    %v1882 = vrot.slane %v1881, 1
    %v1883 = vmax.f32 %v1881, %v1882
    %v1884 = vsel %vm1699, %v1799, -inf
    %v1885 = vmax.f32 %v1798, %v1884
    %v1886 = vrot.slane %v1885, 4
    %v1887 = vmax.f32 %v1885, %v1886
    %v1888 = vrot.slane %v1887, 2
    %v1889 = vmax.f32 %v1887, %v1888
    %v1890 = vrot.slane %v1889, 1
    %v1891 = vmax.f32 %v1889, %v1890
    %v1892 = vsel %vm1699, %v1801, -inf
    %v1893 = vmax.f32 %v1800, %v1892
    %v1894 = vrot.slane %v1893, 4
    %v1895 = vmax.f32 %v1893, %v1894
    %v1896 = vrot.slane %v1895, 2
    %v1897 = vmax.f32 %v1895, %v1896
    %v1898 = vrot.slane %v1897, 1
    %v1899 = vmax.f32 %v1897, %v1898
    %v1900 = vsel %vm1699, %v1803, -inf
    %v1901 = vmax.f32 %v1802, %v1900
    %v1902 = vrot.slane %v1901, 4
    %v1903 = vmax.f32 %v1901, %v1902
    %v1904 = vrot.slane %v1903, 2
    %v1905 = vmax.f32 %v1903, %v1904
    %v1906 = vrot.slane %v1905, 1
    %v1907 = vmax.f32 %v1905, %v1906
    %v1908 = vsel %vm1699, %v1805, -inf
    %v1909 = vmax.f32 %v1804, %v1908
    %v1910 = vrot.slane %v1909, 4
    %v1911 = vmax.f32 %v1909, %v1910
    %v1912 = vrot.slane %v1911, 2
    %v1913 = vmax.f32 %v1911, %v1912
    %v1914 = vrot.slane %v1913, 1
    %v1915 = vmax.f32 %v1913, %v1914
    %v1916 = vsel %vm1699, %v1807, -inf
    %v1917 = vmax.f32 %v1806, %v1916
    %v1918 = vrot.slane %v1917, 4
    %v1919 = vmax.f32 %v1917, %v1918
    %v1920 = vrot.slane %v1919, 2
    %v1921 = vmax.f32 %v1919, %v1920
    %v1922 = vrot.slane %v1921, 1
    %v1923 = vmax.f32 %v1921, %v1922
    %v1924 = vsel %vm1699, %v1809, -inf
    %v1925 = vmax.f32 %v1808, %v1924
    %v1926 = vrot.slane %v1925, 4
    %v1927 = vmax.f32 %v1925, %v1926
    %v1928 = vrot.slane %v1927, 2
    %v1929 = vmax.f32 %v1927, %v1928
    %v1930 = vrot.slane %v1929, 1
    %v1931 = vmax.f32 %v1929, %v1930
    %v1932 = vsel %vm1699, %v1811, -inf
    %v1933 = vmax.f32 %v1810, %v1932
    %v1934 = vrot.slane %v1933, 4
    %v1935 = vmax.f32 %v1933, %v1934
    %v1936 = vrot.slane %v1935, 2
    %v1937 = vmax.f32 %v1935, %v1936
    %v1938 = vrot.slane %v1937, 1
    %v1939 = vmax.f32 %v1937, %v1938
    %v1972 = vrot.slane %v785, 1
    %v1973 = vrot.slane %v789, 1
    %v1974 = vsel %vm1554, %v1972, %v1973
    %v1975 = vrot.slane %v795, 1
    %v1976 = vrot.slane %v799, 1
    %v1977 = vsel %vm1554, %v1975, %v1976
    %v1978 = vrot.slane %v805, 1
    %v1979 = vrot.slane %v809, 1
    %v1980 = vsel %vm1554, %v1978, %v1979
    %v1981 = vrot.slane %v815, 1
    %v1982 = vrot.slane %v819, 1
    %v1983 = vsel %vm1554, %v1981, %v1982
    %v1984 = vrot.slane %v825, 1
    %v1985 = vrot.slane %v829, 1
    %v1986 = vsel %vm1554, %v1984, %v1985
    %v1987 = vrot.slane %v835, 1
    %v1988 = vrot.slane %v839, 1
    %v1989 = vsel %vm1554, %v1987, %v1988
    %v1990 = vrot.slane %v845, 1
    %v1991 = vrot.slane %v849, 1
    %v1992 = vsel %vm1554, %v1990, %v1991
    %v1993 = vrot.slane %v855, 1
    %v1994 = vrot.slane %v859, 1
    %v1995 = vsel %vm1554, %v1993, %v1994
    %v1996 = vrot.slane %v865, 1
    %v1997 = vrot.slane %v869, 1
    %v1998 = vsel %vm1554, %v1996, %v1997
    %v1999 = vrot.slane %v875, 1
    %v2000 = vrot.slane %v879, 1
    %v2001 = vsel %vm1554, %v1999, %v2000
    %v2002 = vrot.slane %v885, 1
    %v2003 = vrot.slane %v889, 1
    %v2004 = vsel %vm1554, %v2002, %v2003
    %v2005 = vrot.slane %v895, 1
    %v2006 = vrot.slane %v899, 1
    %v2007 = vsel %vm1554, %v2005, %v2006
    %v2008 = vrot.slane %v905, 1
    %v2009 = vrot.slane %v909, 1
    %v2010 = vsel %vm1554, %v2008, %v2009
    %v2011 = vrot.slane %v915, 1
    %v2012 = vrot.slane %v919, 1
    %v2013 = vsel %vm1554, %v2011, %v2012
    %v2014 = vrot.slane %v925, 1
    %v2015 = vrot.slane %v929, 1
    %v2016 = vsel %vm1554, %v2014, %v2015
    %v2017 = vrot.slane %v935, 1
    %v2018 = vrot.slane %v939, 1
    %v2019 = vsel %vm1554, %v2017, %v2018
    %v2052 = vadd.f32 %v594, %v1974
    %v2053 = vadd.f32 %v598, %v1973
    %v2054 = vadd.f32 %v604, %v1977
    %v2055 = vadd.f32 %v608, %v1976
    %v2056 = vadd.f32 %v614, %v1980
    %v2057 = vadd.f32 %v618, %v1979
    %v2058 = vadd.f32 %v624, %v1983
    %v2059 = vadd.f32 %v628, %v1982
    %v2060 = vadd.f32 %v634, %v1986
    %v2061 = vadd.f32 %v638, %v1985
    %v2062 = vadd.f32 %v644, %v1989
    %v2063 = vadd.f32 %v648, %v1988
    %v2064 = vadd.f32 %v654, %v1992
    %v2065 = vadd.f32 %v658, %v1991
    %v2066 = vadd.f32 %v664, %v1995
    %v2067 = vadd.f32 %v668, %v1994
    %v2068 = vadd.f32 %v674, %v1998
    %v2069 = vadd.f32 %v678, %v1997
    %v2070 = vadd.f32 %v684, %v2001
    %v2071 = vadd.f32 %v688, %v2000
    %v2072 = vadd.f32 %v694, %v2004
    %v2073 = vadd.f32 %v698, %v2003
    %v2074 = vadd.f32 %v704, %v2007
    %v2075 = vadd.f32 %v708, %v2006
    %v2076 = vadd.f32 %v714, %v2010
    %v2077 = vadd.f32 %v718, %v2009
    %v2078 = vadd.f32 %v724, %v2013
    %v2079 = vadd.f32 %v728, %v2012
    %v2080 = vadd.f32 %v734, %v2016
    %v2081 = vadd.f32 %v738, %v2015
    %v2082 = vadd.f32 %v744, %v2019
    %v2083 = vadd.f32 %v748, %v2018
    %v2116 = vrot.slane %v787, 2
    %v2117 = vrot.slane %v791, 2
    %v2118 = vsel %vm1699, %v2116, %v2117
    %v2119 = vrot.slane %v797, 2
    %v2120 = vrot.slane %v801, 2
    %v2121 = vsel %vm1699, %v2119, %v2120
    %v2122 = vrot.slane %v807, 2
    %v2123 = vrot.slane %v811, 2
    %v2124 = vsel %vm1699, %v2122, %v2123
    %v2125 = vrot.slane %v817, 2
    %v2126 = vrot.slane %v821, 2
    %v2127 = vsel %vm1699, %v2125, %v2126
    %v2128 = vrot.slane %v827, 2
    %v2129 = vrot.slane %v831, 2
    %v2130 = vsel %vm1699, %v2128, %v2129
    %v2131 = vrot.slane %v837, 2
    %v2132 = vrot.slane %v841, 2
    %v2133 = vsel %vm1699, %v2131, %v2132
    %v2134 = vrot.slane %v847, 2
    %v2135 = vrot.slane %v851, 2
    %v2136 = vsel %vm1699, %v2134, %v2135
    %v2137 = vrot.slane %v857, 2
    %v2138 = vrot.slane %v861, 2
    %v2139 = vsel %vm1699, %v2137, %v2138
    %v2140 = vrot.slane %v867, 2
    %v2141 = vrot.slane %v871, 2
    %v2142 = vsel %vm1699, %v2140, %v2141
    %v2143 = vrot.slane %v877, 2
    %v2144 = vrot.slane %v881, 2
    %v2145 = vsel %vm1699, %v2143, %v2144
    %v2146 = vrot.slane %v887, 2
    %v2147 = vrot.slane %v891, 2
    %v2148 = vsel %vm1699, %v2146, %v2147
    %v2149 = vrot.slane %v897, 2
    %v2150 = vrot.slane %v901, 2
    %v2151 = vsel %vm1699, %v2149, %v2150
    %v2152 = vrot.slane %v907, 2
    %v2153 = vrot.slane %v911, 2
    %v2154 = vsel %vm1699, %v2152, %v2153
    %v2155 = vrot.slane %v917, 2
    %v2156 = vrot.slane %v921, 2
    %v2157 = vsel %vm1699, %v2155, %v2156
    %v2158 = vrot.slane %v927, 2
    %v2159 = vrot.slane %v931, 2
    %v2160 = vsel %vm1699, %v2158, %v2159
    %v2161 = vrot.slane %v937, 2
    %v2162 = vrot.slane %v941, 2
    %v2163 = vsel %vm1699, %v2161, %v2162
    %v2196 = vadd.f32 %v2052, %v2118
    %v2197 = vadd.f32 %v2053, %v2117
    %v2198 = vadd.f32 %v2054, %v2121
    %v2199 = vadd.f32 %v2055, %v2120
    %v2200 = vadd.f32 %v2056, %v2124
    %v2201 = vadd.f32 %v2057, %v2123
    %v2202 = vadd.f32 %v2058, %v2127
    %v2203 = vadd.f32 %v2059, %v2126
    %v2204 = vadd.f32 %v2060, %v2130
    %v2205 = vadd.f32 %v2061, %v2129
    %v2206 = vadd.f32 %v2062, %v2133
    %v2207 = vadd.f32 %v2063, %v2132
    %v2208 = vadd.f32 %v2064, %v2136
    %v2209 = vadd.f32 %v2065, %v2135
    %v2210 = vadd.f32 %v2066, %v2139
    %v2211 = vadd.f32 %v2067, %v2138
    %v2212 = vadd.f32 %v2068, %v2142
    %v2213 = vadd.f32 %v2069, %v2141
    %v2214 = vadd.f32 %v2070, %v2145
    %v2215 = vadd.f32 %v2071, %v2144
    %v2216 = vadd.f32 %v2072, %v2148
    %v2217 = vadd.f32 %v2073, %v2147
    %v2218 = vadd.f32 %v2074, %v2151
    %v2219 = vadd.f32 %v2075, %v2150
    %v2220 = vadd.f32 %v2076, %v2154
    %v2221 = vadd.f32 %v2077, %v2153
    %v2222 = vadd.f32 %v2078, %v2157
    %v2223 = vadd.f32 %v2079, %v2156
    %v2224 = vadd.f32 %v2080, %v2160
    %v2225 = vadd.f32 %v2081, %v2159
    %v2226 = vadd.f32 %v2082, %v2163
    %v2227 = vadd.f32 %v2083, %v2162
    %vm2260 = vcmask 1044480
    %v2261 = vrot.slane %v978, 3
    %v2262 = vrot.slane %v982, 3
    %v2263 = vsel %vm2260, %v2261, %v2262
    %v2264 = vrot.slane %v988, 3
    %v2265 = vrot.slane %v992, 3
    %v2266 = vsel %vm2260, %v2264, %v2265
    %v2267 = vrot.slane %v998, 3
    %v2268 = vrot.slane %v1002, 3
    %v2269 = vsel %vm2260, %v2267, %v2268
    %v2270 = vrot.slane %v1008, 3
    %v2271 = vrot.slane %v1012, 3
    %v2272 = vsel %vm2260, %v2270, %v2271
    %v2273 = vrot.slane %v1018, 3
    %v2274 = vrot.slane %v1022, 3
    %v2275 = vsel %vm2260, %v2273, %v2274
    %v2276 = vrot.slane %v1028, 3
    %v2277 = vrot.slane %v1032, 3
    %v2278 = vsel %vm2260, %v2276, %v2277
    %v2279 = vrot.slane %v1038, 3
    %v2280 = vrot.slane %v1042, 3
    %v2281 = vsel %vm2260, %v2279, %v2280
    %v2282 = vrot.slane %v1048, 3
    %v2283 = vrot.slane %v1052, 3
    %v2284 = vsel %vm2260, %v2282, %v2283
    %v2285 = vrot.slane %v1058, 3
    %v2286 = vrot.slane %v1062, 3
    %v2287 = vsel %vm2260, %v2285, %v2286
    %v2288 = vrot.slane %v1068, 3
    %v2289 = vrot.slane %v1072, 3
    %v2290 = vsel %vm2260, %v2288, %v2289
    %v2291 = vrot.slane %v1078, 3
    %v2292 = vrot.slane %v1082, 3
    %v2293 = vsel %vm2260, %v2291, %v2292
    %v2294 = vrot.slane %v1088, 3
    %v2295 = vrot.slane %v1092, 3
    %v2296 = vsel %vm2260, %v2294, %v2295
    %v2297 = vrot.slane %v1098, 3
    %v2298 = vrot.slane %v1102, 3
    %v2299 = vsel %vm2260, %v2297, %v2298
    %v2300 = vrot.slane %v1108, 3
    %v2301 = vrot.slane %v1112, 3
    %v2302 = vsel %vm2260, %v2300, %v2301
    %v2303 = vrot.slane %v1118, 3
    %v2304 = vrot.slane %v1122, 3
    %v2305 = vsel %vm2260, %v2303, %v2304
    %v2306 = vrot.slane %v1128, 3
    %v2307 = vrot.slane %v1132, 3
    %v2308 = vsel %vm2260, %v2306, %v2307
    %v2341 = vadd.f32 %v2196, %v2263
    %v2342 = vadd.f32 %v2197, %v2262
    %v2343 = vadd.f32 %v2198, %v2266
    %v2344 = vadd.f32 %v2199, %v2265
    %v2345 = vadd.f32 %v2200, %v2269
    %v2346 = vadd.f32 %v2201, %v2268
    %v2347 = vadd.f32 %v2202, %v2272
    %v2348 = vadd.f32 %v2203, %v2271
    %v2349 = vadd.f32 %v2204, %v2275
    %v2350 = vadd.f32 %v2205, %v2274
    %v2351 = vadd.f32 %v2206, %v2278
    %v2352 = vadd.f32 %v2207, %v2277
    %v2353 = vadd.f32 %v2208, %v2281
    %v2354 = vadd.f32 %v2209, %v2280
    %v2355 = vadd.f32 %v2210, %v2284
    %v2356 = vadd.f32 %v2211, %v2283
    %v2357 = vadd.f32 %v2212, %v2287
    %v2358 = vadd.f32 %v2213, %v2286
    %v2359 = vadd.f32 %v2214, %v2290
    %v2360 = vadd.f32 %v2215, %v2289
    %v2361 = vadd.f32 %v2216, %v2293
    %v2362 = vadd.f32 %v2217, %v2292
    %v2363 = vadd.f32 %v2218, %v2296
    %v2364 = vadd.f32 %v2219, %v2295
    %v2365 = vadd.f32 %v2220, %v2299
    %v2366 = vadd.f32 %v2221, %v2298
    %v2367 = vadd.f32 %v2222, %v2302
    %v2368 = vadd.f32 %v2223, %v2301
    %v2369 = vadd.f32 %v2224, %v2305
    %v2370 = vadd.f32 %v2225, %v2304
    %v2371 = vadd.f32 %v2226, %v2308
    %v2372 = vadd.f32 %v2227, %v2307
    %v2373 = vsel %vm2260, %v2342, -inf
    %v2374 = vmax.f32 %v2341, %v2373
    %v2375 = vrot.slane %v2374, 4
    %v2376 = vmax.f32 %v2374, %v2375
    %v2377 = vrot.slane %v2376, 2
    %v2378 = vmax.f32 %v2376, %v2377
    %v2379 = vrot.slane %v2378, 1
    %v2380 = vmax.f32 %v2378, %v2379
    %v2381 = vsel %vm2260, %v2344, -inf
    %v2382 = vmax.f32 %v2343, %v2381
    %v2383 = vrot.slane %v2382, 4
    %v2384 = vmax.f32 %v2382, %v2383
    %v2385 = vrot.slane %v2384, 2
    %v2386 = vmax.f32 %v2384, %v2385
    %v2387 = vrot.slane %v2386, 1
    %v2388 = vmax.f32 %v2386, %v2387
    %v2389 = vsel %vm2260, %v2346, -inf
    %v2390 = vmax.f32 %v2345, %v2389
    %v2391 = vrot.slane %v2390, 4
    %v2392 = vmax.f32 %v2390, %v2391
    %v2393 = vrot.slane %v2392, 2
    %v2394 = vmax.f32 %v2392, %v2393
    %v2395 = vrot.slane %v2394, 1
    %v2396 = vmax.f32 %v2394, %v2395
    %v2397 = vsel %vm2260, %v2348, -inf
    %v2398 = vmax.f32 %v2347, %v2397
    %v2399 = vrot.slane %v2398, 4
    %v2400 = vmax.f32 %v2398, %v2399
    %v2401 = vrot.slane %v2400, 2
    %v2402 = vmax.f32 %v2400, %v2401
    %v2403 = vrot.slane %v2402, 1
    %v2404 = vmax.f32 %v2402, %v2403
    %v2405 = vsel %vm2260, %v2350, -inf
    %v2406 = vmax.f32 %v2349, %v2405
    %v2407 = vrot.slane %v2406, 4
    %v2408 = vmax.f32 %v2406, %v2407
    %v2409 = vrot.slane %v2408, 2
    %v2410 = vmax.f32 %v2408, %v2409
    %v2411 = vrot.slane %v2410, 1
    %v2412 = vmax.f32 %v2410, %v2411
    %v2413 = vsel %vm2260, %v2352, -inf
    %v2414 = vmax.f32 %v2351, %v2413
    %v2415 = vrot.slane %v2414, 4
    %v2416 = vmax.f32 %v2414, %v2415
    %v2417 = vrot.slane %v2416, 2
    %v2418 = vmax.f32 %v2416, %v2417
    %v2419 = vrot.slane %v2418, 1
    %v2420 = vmax.f32 %v2418, %v2419
    %v2421 = vsel %vm2260, %v2354, -inf
    %v2422 = vmax.f32 %v2353, %v2421
    %v2423 = vrot.slane %v2422, 4
    %v2424 = vmax.f32 %v2422, %v2423
    %v2425 = vrot.slane %v2424, 2
    %v2426 = vmax.f32 %v2424, %v2425
    %v2427 = vrot.slane %v2426, 1
    %v2428 = vmax.f32 %v2426, %v2427
    %v2429 = vsel %vm2260, %v2356, -inf
    %v2430 = vmax.f32 %v2355, %v2429
    %v2431 = vrot.slane %v2430, 4
    %v2432 = vmax.f32 %v2430, %v2431
    %v2433 = vrot.slane %v2432, 2
    %v2434 = vmax.f32 %v2432, %v2433
    %v2435 = vrot.slane %v2434, 1
    %v2436 = vmax.f32 %v2434, %v2435
    %v2437 = vsel %vm2260, %v2358, -inf
    %v2438 = vmax.f32 %v2357, %v2437
    %v2439 = vrot.slane %v2438, 4
    %v2440 = vmax.f32 %v2438, %v2439
    %v2441 = vrot.slane %v2440, 2
    %v2442 = vmax.f32 %v2440, %v2441
    %v2443 = vrot.slane %v2442, 1
    %v2444 = vmax.f32 %v2442, %v2443
    %v2445 = vsel %vm2260, %v2360, -inf
    %v2446 = vmax.f32 %v2359, %v2445
    %v2447 = vrot.slane %v2446, 4
    %v2448 = vmax.f32 %v2446, %v2447
    %v2449 = vrot.slane %v2448, 2
    %v2450 = vmax.f32 %v2448, %v2449
    %v2451 = vrot.slane %v2450, 1
    %v2452 = vmax.f32 %v2450, %v2451
    %v2453 = vsel %vm2260, %v2362, -inf
    %v2454 = vmax.f32 %v2361, %v2453
    %v2455 = vrot.slane %v2454, 4
    %v2456 = vmax.f32 %v2454, %v2455
    %v2457 = vrot.slane %v2456, 2
    %v2458 = vmax.f32 %v2456, %v2457
    %v2459 = vrot.slane %v2458, 1
    %v2460 = vmax.f32 %v2458, %v2459
    %v2461 = vsel %vm2260, %v2364, -inf
    %v2462 = vmax.f32 %v2363, %v2461
    %v2463 = vrot.slane %v2462, 4
    %v2464 = vmax.f32 %v2462, %v2463
    %v2465 = vrot.slane %v2464, 2
    %v2466 = vmax.f32 %v2464, %v2465
    %v2467 = vrot.slane %v2466, 1
    %v2468 = vmax.f32 %v2466, %v2467
    %v2469 = vsel %vm2260, %v2366, -inf
    %v2470 = vmax.f32 %v2365, %v2469
    %v2471 = vrot.slane %v2470, 4
    %v2472 = vmax.f32 %v2470, %v2471
    %v2473 = vrot.slane %v2472, 2
    %v2474 = vmax.f32 %v2472, %v2473
    %v2475 = vrot.slane %v2474, 1
    %v2476 = vmax.f32 %v2474, %v2475
    %v2477 = vsel %vm2260, %v2368, -inf
    %v2478 = vmax.f32 %v2367, %v2477
    %v2479 = vrot.slane %v2478, 4
    %v2480 = vmax.f32 %v2478, %v2479
    %v2481 = vrot.slane %v2480, 2
    %v2482 = vmax.f32 %v2480, %v2481
    %v2483 = vrot.slane %v2482, 1
    %v2484 = vmax.f32 %v2482, %v2483
    %v2485 = vsel %vm2260, %v2370, -inf
    %v2486 = vmax.f32 %v2369, %v2485
    %v2487 = vrot.slane %v2486, 4
    %v2488 = vmax.f32 %v2486, %v2487
    %v2489 = vrot.slane %v2488, 2
    %v2490 = vmax.f32 %v2488, %v2489
    %v2491 = vrot.slane %v2490, 1
    %v2492 = vmax.f32 %v2490, %v2491
    %v2493 = vsel %vm2260, %v2372, -inf
    %v2494 = vmax.f32 %v2371, %v2493
    %v2495 = vrot.slane %v2494, 4
    %v2496 = vmax.f32 %v2494, %v2495
    %v2497 = vrot.slane %v2496, 2
    %v2498 = vmax.f32 %v2496, %v2497
    %v2499 = vrot.slane %v2498, 1
    %v2500 = vmax.f32 %v2498, %v2499
    %v2533 = vrot.slane %v1171, 1
    %v2534 = vrot.slane %v1175, 1
    %v2535 = vsel %vm1554, %v2533, %v2534
    %v2536 = vrot.slane %v1181, 1
    %v2537 = vrot.slane %v1185, 1
    %v2538 = vsel %vm1554, %v2536, %v2537
    %v2539 = vrot.slane %v1191, 1
    %v2540 = vrot.slane %v1195, 1
    %v2541 = vsel %vm1554, %v2539, %v2540
    %v2542 = vrot.slane %v1201, 1
    %v2543 = vrot.slane %v1205, 1
    %v2544 = vsel %vm1554, %v2542, %v2543
    %v2545 = vrot.slane %v1211, 1
    %v2546 = vrot.slane %v1215, 1
    %v2547 = vsel %vm1554, %v2545, %v2546
    %v2548 = vrot.slane %v1221, 1
    %v2549 = vrot.slane %v1225, 1
    %v2550 = vsel %vm1554, %v2548, %v2549
    %v2551 = vrot.slane %v1231, 1
    %v2552 = vrot.slane %v1235, 1
    %v2553 = vsel %vm1554, %v2551, %v2552
    %v2554 = vrot.slane %v1241, 1
    %v2555 = vrot.slane %v1245, 1
    %v2556 = vsel %vm1554, %v2554, %v2555
    %v2557 = vrot.slane %v1251, 1
    %v2558 = vrot.slane %v1255, 1
    %v2559 = vsel %vm1554, %v2557, %v2558
    %v2560 = vrot.slane %v1261, 1
    %v2561 = vrot.slane %v1265, 1
    %v2562 = vsel %vm1554, %v2560, %v2561
    %v2563 = vrot.slane %v1271, 1
    %v2564 = vrot.slane %v1275, 1
    %v2565 = vsel %vm1554, %v2563, %v2564
    %v2566 = vrot.slane %v1281, 1
    %v2567 = vrot.slane %v1285, 1
    %v2568 = vsel %vm1554, %v2566, %v2567
    %v2569 = vrot.slane %v1291, 1
    %v2570 = vrot.slane %v1295, 1
    %v2571 = vsel %vm1554, %v2569, %v2570
    %v2572 = vrot.slane %v1301, 1
    %v2573 = vrot.slane %v1305, 1
    %v2574 = vsel %vm1554, %v2572, %v2573
    %v2575 = vrot.slane %v1311, 1
    %v2576 = vrot.slane %v1315, 1
    %v2577 = vsel %vm1554, %v2575, %v2576
    %v2578 = vrot.slane %v1321, 1
    %v2579 = vrot.slane %v1325, 1
    %v2580 = vsel %vm1554, %v2578, %v2579
    %v2613 = vadd.f32 %v980, %v2535
    %v2614 = vadd.f32 %v984, %v2534
    %v2615 = vadd.f32 %v990, %v2538
    %v2616 = vadd.f32 %v994, %v2537
    %v2617 = vadd.f32 %v1000, %v2541
    %v2618 = vadd.f32 %v1004, %v2540
    %v2619 = vadd.f32 %v1010, %v2544
    %v2620 = vadd.f32 %v1014, %v2543
    %v2621 = vadd.f32 %v1020, %v2547
    %v2622 = vadd.f32 %v1024, %v2546
    %v2623 = vadd.f32 %v1030, %v2550
    %v2624 = vadd.f32 %v1034, %v2549
    %v2625 = vadd.f32 %v1040, %v2553
    %v2626 = vadd.f32 %v1044, %v2552
    %v2627 = vadd.f32 %v1050, %v2556
    %v2628 = vadd.f32 %v1054, %v2555
    %v2629 = vadd.f32 %v1060, %v2559
    %v2630 = vadd.f32 %v1064, %v2558
    %v2631 = vadd.f32 %v1070, %v2562
    %v2632 = vadd.f32 %v1074, %v2561
    %v2633 = vadd.f32 %v1080, %v2565
    %v2634 = vadd.f32 %v1084, %v2564
    %v2635 = vadd.f32 %v1090, %v2568
    %v2636 = vadd.f32 %v1094, %v2567
    %v2637 = vadd.f32 %v1100, %v2571
    %v2638 = vadd.f32 %v1104, %v2570
    %v2639 = vadd.f32 %v1110, %v2574
    %v2640 = vadd.f32 %v1114, %v2573
    %v2641 = vadd.f32 %v1120, %v2577
    %v2642 = vadd.f32 %v1124, %v2576
    %v2643 = vadd.f32 %v1130, %v2580
    %v2644 = vadd.f32 %v1134, %v2579
    %v2677 = vrot.slane %v1173, 2
    %v2678 = vrot.slane %v1177, 2
    %v2679 = vsel %vm1699, %v2677, %v2678
    %v2680 = vrot.slane %v1183, 2
    %v2681 = vrot.slane %v1187, 2
    %v2682 = vsel %vm1699, %v2680, %v2681
    %v2683 = vrot.slane %v1193, 2
    %v2684 = vrot.slane %v1197, 2
    %v2685 = vsel %vm1699, %v2683, %v2684
    %v2686 = vrot.slane %v1203, 2
    %v2687 = vrot.slane %v1207, 2
    %v2688 = vsel %vm1699, %v2686, %v2687
    %v2689 = vrot.slane %v1213, 2
    %v2690 = vrot.slane %v1217, 2
    %v2691 = vsel %vm1699, %v2689, %v2690
    %v2692 = vrot.slane %v1223, 2
    %v2693 = vrot.slane %v1227, 2
    %v2694 = vsel %vm1699, %v2692, %v2693
    %v2695 = vrot.slane %v1233, 2
    %v2696 = vrot.slane %v1237, 2
    %v2697 = vsel %vm1699, %v2695, %v2696
    %v2698 = vrot.slane %v1243, 2
    %v2699 = vrot.slane %v1247, 2
    %v2700 = vsel %vm1699, %v2698, %v2699
    %v2701 = vrot.slane %v1253, 2
    %v2702 = vrot.slane %v1257, 2
    %v2703 = vsel %vm1699, %v2701, %v2702
    %v2704 = vrot.slane %v1263, 2
    %v2705 = vrot.slane %v1267, 2
    %v2706 = vsel %vm1699, %v2704, %v2705
    %v2707 = vrot.slane %v1273, 2
    %v2708 = vrot.slane %v1277, 2
    %v2709 = vsel %vm1699, %v2707, %v2708
    %v2710 = vrot.slane %v1283, 2
    %v2711 = vrot.slane %v1287, 2
    %v2712 = vsel %vm1699, %v2710, %v2711
    %v2713 = vrot.slane %v1293, 2
    %v2714 = vrot.slane %v1297, 2
    %v2715 = vsel %vm1699, %v2713, %v2714
    %v2716 = vrot.slane %v1303, 2
    %v2717 = vrot.slane %v1307, 2
    %v2718 = vsel %vm1699, %v2716, %v2717
    %v2719 = vrot.slane %v1313, 2
    %v2720 = vrot.slane %v1317, 2
    %v2721 = vsel %vm1699, %v2719, %v2720
    %v2722 = vrot.slane %v1323, 2
    %v2723 = vrot.slane %v1327, 2
    %v2724 = vsel %vm1699, %v2722, %v2723
    %v2757 = vadd.f32 %v2613, %v2679
    %v2758 = vadd.f32 %v2614, %v2678
    %v2759 = vadd.f32 %v2615, %v2682
    %v2760 = vadd.f32 %v2616, %v2681
    %v2761 = vadd.f32 %v2617, %v2685
    %v2762 = vadd.f32 %v2618, %v2684
    %v2763 = vadd.f32 %v2619, %v2688
    %v2764 = vadd.f32 %v2620, %v2687
    %v2765 = vadd.f32 %v2621, %v2691
    %v2766 = vadd.f32 %v2622, %v2690
    %v2767 = vadd.f32 %v2623, %v2694
    %v2768 = vadd.f32 %v2624, %v2693
    %v2769 = vadd.f32 %v2625, %v2697
    %v2770 = vadd.f32 %v2626, %v2696
    %v2771 = vadd.f32 %v2627, %v2700
    %v2772 = vadd.f32 %v2628, %v2699
    %v2773 = vadd.f32 %v2629, %v2703
    %v2774 = vadd.f32 %v2630, %v2702
    %v2775 = vadd.f32 %v2631, %v2706
    %v2776 = vadd.f32 %v2632, %v2705
    %v2777 = vadd.f32 %v2633, %v2709
    %v2778 = vadd.f32 %v2634, %v2708
    %v2779 = vadd.f32 %v2635, %v2712
    %v2780 = vadd.f32 %v2636, %v2711
    %v2781 = vadd.f32 %v2637, %v2715
    %v2782 = vadd.f32 %v2638, %v2714
    %v2783 = vadd.f32 %v2639, %v2718
    %v2784 = vadd.f32 %v2640, %v2717
    %v2785 = vadd.f32 %v2641, %v2721
    %v2786 = vadd.f32 %v2642, %v2720
    %v2787 = vadd.f32 %v2643, %v2724
    %v2788 = vadd.f32 %v2644, %v2723
    %v2821 = vrot.slane %v1364, 3
    %v2822 = vrot.slane %v1368, 3
    %v2823 = vsel %vm2260, %v2821, %v2822
    %v2824 = vrot.slane %v1374, 3
    %v2825 = vrot.slane %v1378, 3
    %v2826 = vsel %vm2260, %v2824, %v2825
    %v2827 = vrot.slane %v1384, 3
    %v2828 = vrot.slane %v1388, 3
    %v2829 = vsel %vm2260, %v2827, %v2828
    %v2830 = vrot.slane %v1394, 3
    %v2831 = vrot.slane %v1398, 3
    %v2832 = vsel %vm2260, %v2830, %v2831
    %v2833 = vrot.slane %v1404, 3
    %v2834 = vrot.slane %v1408, 3
    %v2835 = vsel %vm2260, %v2833, %v2834
    %v2836 = vrot.slane %v1414, 3
    %v2837 = vrot.slane %v1418, 3
    %v2838 = vsel %vm2260, %v2836, %v2837
    %v2839 = vrot.slane %v1424, 3
    %v2840 = vrot.slane %v1428, 3
    %v2841 = vsel %vm2260, %v2839, %v2840
    %v2842 = vrot.slane %v1434, 3
    %v2843 = vrot.slane %v1438, 3
    %v2844 = vsel %vm2260, %v2842, %v2843
    %v2845 = vrot.slane %v1444, 3
    %v2846 = vrot.slane %v1448, 3
    %v2847 = vsel %vm2260, %v2845, %v2846
    %v2848 = vrot.slane %v1454, 3
    %v2849 = vrot.slane %v1458, 3
    %v2850 = vsel %vm2260, %v2848, %v2849
    %v2851 = vrot.slane %v1464, 3
    %v2852 = vrot.slane %v1468, 3
    %v2853 = vsel %vm2260, %v2851, %v2852
    %v2854 = vrot.slane %v1474, 3
    %v2855 = vrot.slane %v1478, 3
    %v2856 = vsel %vm2260, %v2854, %v2855
    %v2857 = vrot.slane %v1484, 3
    %v2858 = vrot.slane %v1488, 3
    %v2859 = vsel %vm2260, %v2857, %v2858
    %v2860 = vrot.slane %v1494, 3
    %v2861 = vrot.slane %v1498, 3
    %v2862 = vsel %vm2260, %v2860, %v2861
    %v2863 = vrot.slane %v1504, 3
    %v2864 = vrot.slane %v1508, 3
    %v2865 = vsel %vm2260, %v2863, %v2864
    %v2866 = vrot.slane %v1514, 3
    %v2867 = vrot.slane %v1518, 3
    %v2868 = vsel %vm2260, %v2866, %v2867
    %v2901 = vadd.f32 %v2757, %v2823
    %v2902 = vadd.f32 %v2758, %v2822
    %v2903 = vadd.f32 %v2759, %v2826
    %v2904 = vadd.f32 %v2760, %v2825
    %v2905 = vadd.f32 %v2761, %v2829
    %v2906 = vadd.f32 %v2762, %v2828
    %v2907 = vadd.f32 %v2763, %v2832
    %v2908 = vadd.f32 %v2764, %v2831
    %v2909 = vadd.f32 %v2765, %v2835
    %v2910 = vadd.f32 %v2766, %v2834
    %v2911 = vadd.f32 %v2767, %v2838
    %v2912 = vadd.f32 %v2768, %v2837
    %v2913 = vadd.f32 %v2769, %v2841
    %v2914 = vadd.f32 %v2770, %v2840
    %v2915 = vadd.f32 %v2771, %v2844
    %v2916 = vadd.f32 %v2772, %v2843
    %v2917 = vadd.f32 %v2773, %v2847
    %v2918 = vadd.f32 %v2774, %v2846
    %v2919 = vadd.f32 %v2775, %v2850
    %v2920 = vadd.f32 %v2776, %v2849
    %v2921 = vadd.f32 %v2777, %v2853
    %v2922 = vadd.f32 %v2778, %v2852
    %v2923 = vadd.f32 %v2779, %v2856
    %v2924 = vadd.f32 %v2780, %v2855
    %v2925 = vadd.f32 %v2781, %v2859
    %v2926 = vadd.f32 %v2782, %v2858
    %v2927 = vadd.f32 %v2783, %v2862
    %v2928 = vadd.f32 %v2784, %v2861
    %v2929 = vadd.f32 %v2785, %v2865
    %v2930 = vadd.f32 %v2786, %v2864
    %v2931 = vadd.f32 %v2787, %v2868
    %v2932 = vadd.f32 %v2788, %v2867
    %vm2965 = vcmask 1043456
    %v2966 = vrot.slane %v1366, 4
    %v2967 = vrot.slane %v1370, 4
    %v2968 = vsel %vm2965, %v2966, %v2967
    %v2969 = vrot.slane %v1376, 4
    %v2970 = vrot.slane %v1380, 4
    %v2971 = vsel %vm2965, %v2969, %v2970
    %v2972 = vrot.slane %v1386, 4
    %v2973 = vrot.slane %v1390, 4
    %v2974 = vsel %vm2965, %v2972, %v2973
    %v2975 = vrot.slane %v1396, 4
    %v2976 = vrot.slane %v1400, 4
    %v2977 = vsel %vm2965, %v2975, %v2976
    %v2978 = vrot.slane %v1406, 4
    %v2979 = vrot.slane %v1410, 4
    %v2980 = vsel %vm2965, %v2978, %v2979
    %v2981 = vrot.slane %v1416, 4
    %v2982 = vrot.slane %v1420, 4
    %v2983 = vsel %vm2965, %v2981, %v2982
    %v2984 = vrot.slane %v1426, 4
    %v2985 = vrot.slane %v1430, 4
    %v2986 = vsel %vm2965, %v2984, %v2985
    %v2987 = vrot.slane %v1436, 4
    %v2988 = vrot.slane %v1440, 4
    %v2989 = vsel %vm2965, %v2987, %v2988
    %v2990 = vrot.slane %v1446, 4
    %v2991 = vrot.slane %v1450, 4
    %v2992 = vsel %vm2965, %v2990, %v2991
    %v2993 = vrot.slane %v1456, 4
    %v2994 = vrot.slane %v1460, 4
    %v2995 = vsel %vm2965, %v2993, %v2994
    %v2996 = vrot.slane %v1466, 4
    %v2997 = vrot.slane %v1470, 4
    %v2998 = vsel %vm2965, %v2996, %v2997
    %v2999 = vrot.slane %v1476, 4
    %v3000 = vrot.slane %v1480, 4
    %v3001 = vsel %vm2965, %v2999, %v3000
    %v3002 = vrot.slane %v1486, 4
    %v3003 = vrot.slane %v1490, 4
    %v3004 = vsel %vm2965, %v3002, %v3003
    %v3005 = vrot.slane %v1496, 4
    %v3006 = vrot.slane %v1500, 4
    %v3007 = vsel %vm2965, %v3005, %v3006
    %v3008 = vrot.slane %v1506, 4
    %v3009 = vrot.slane %v1510, 4
    %v3010 = vsel %vm2965, %v3008, %v3009
    %v3011 = vrot.slane %v1516, 4
    %v3012 = vrot.slane %v1520, 4
    %v3013 = vsel %vm2965, %v3011, %v3012
    %v3046 = vadd.f32 %v2901, %v2968
    %v3047 = vadd.f32 %v2902, %v2967
    %v3048 = vadd.f32 %v2903, %v2971
    %v3049 = vadd.f32 %v2904, %v2970
    %v3050 = vadd.f32 %v2905, %v2974
    %v3051 = vadd.f32 %v2906, %v2973
    %v3052 = vadd.f32 %v2907, %v2977
    %v3053 = vadd.f32 %v2908, %v2976
    %v3054 = vadd.f32 %v2909, %v2980
    %v3055 = vadd.f32 %v2910, %v2979
    %v3056 = vadd.f32 %v2911, %v2983
    %v3057 = vadd.f32 %v2912, %v2982
    %v3058 = vadd.f32 %v2913, %v2986
    %v3059 = vadd.f32 %v2914, %v2985
    %v3060 = vadd.f32 %v2915, %v2989
    %v3061 = vadd.f32 %v2916, %v2988
    %v3062 = vadd.f32 %v2917, %v2992
    %v3063 = vadd.f32 %v2918, %v2991
    %v3064 = vadd.f32 %v2919, %v2995
    %v3065 = vadd.f32 %v2920, %v2994
    %v3066 = vadd.f32 %v2921, %v2998
    %v3067 = vadd.f32 %v2922, %v2997
    %v3068 = vadd.f32 %v2923, %v3001
    %v3069 = vadd.f32 %v2924, %v3000
    %v3070 = vadd.f32 %v2925, %v3004
    %v3071 = vadd.f32 %v2926, %v3003
    %v3072 = vadd.f32 %v2927, %v3007
    %v3073 = vadd.f32 %v2928, %v3006
    %v3074 = vadd.f32 %v2929, %v3010
    %v3075 = vadd.f32 %v2930, %v3009
    %v3076 = vadd.f32 %v2931, %v3013
    %v3077 = vadd.f32 %v2932, %v3012
    %v3078 = vsel %vm2965, %v3047, -inf
    %v3079 = vmax.f32 %v3046, %v3078
    %v3080 = vrot.slane %v3079, 4
    %v3081 = vmax.f32 %v3079, %v3080
    %v3082 = vrot.slane %v3081, 2
    %v3083 = vmax.f32 %v3081, %v3082
    %v3084 = vrot.slane %v3083, 1
    %v3085 = vmax.f32 %v3083, %v3084
    %v3086 = vsel %vm2965, %v3049, -inf
    %v3087 = vmax.f32 %v3048, %v3086
    %v3088 = vrot.slane %v3087, 4
    %v3089 = vmax.f32 %v3087, %v3088
    %v3090 = vrot.slane %v3089, 2
    %v3091 = vmax.f32 %v3089, %v3090
    %v3092 = vrot.slane %v3091, 1
    %v3093 = vmax.f32 %v3091, %v3092
    %v3094 = vsel %vm2965, %v3051, -inf
    %v3095 = vmax.f32 %v3050, %v3094
    %v3096 = vrot.slane %v3095, 4
    %v3097 = vmax.f32 %v3095, %v3096
    %v3098 = vrot.slane %v3097, 2
    %v3099 = vmax.f32 %v3097, %v3098
    %v3100 = vrot.slane %v3099, 1
    %v3101 = vmax.f32 %v3099, %v3100
    %v3102 = vsel %vm2965, %v3053, -inf
    %v3103 = vmax.f32 %v3052, %v3102
    %v3104 = vrot.slane %v3103, 4
    %v3105 = vmax.f32 %v3103, %v3104
    %v3106 = vrot.slane %v3105, 2
    %v3107 = vmax.f32 %v3105, %v3106
    %v3108 = vrot.slane %v3107, 1
    %v3109 = vmax.f32 %v3107, %v3108
    %v3110 = vsel %vm2965, %v3055, -inf
    %v3111 = vmax.f32 %v3054, %v3110
    %v3112 = vrot.slane %v3111, 4
    %v3113 = vmax.f32 %v3111, %v3112
    %v3114 = vrot.slane %v3113, 2
    %v3115 = vmax.f32 %v3113, %v3114
    %v3116 = vrot.slane %v3115, 1
    %v3117 = vmax.f32 %v3115, %v3116
    %v3118 = vsel %vm2965, %v3057, -inf
    %v3119 = vmax.f32 %v3056, %v3118
    %v3120 = vrot.slane %v3119, 4
    %v3121 = vmax.f32 %v3119, %v3120
    %v3122 = vrot.slane %v3121, 2
    %v3123 = vmax.f32 %v3121, %v3122
    %v3124 = vrot.slane %v3123, 1
    %v3125 = vmax.f32 %v3123, %v3124
    %v3126 = vsel %vm2965, %v3059, -inf
    %v3127 = vmax.f32 %v3058, %v3126
    %v3128 = vrot.slane %v3127, 4
    %v3129 = vmax.f32 %v3127, %v3128
    %v3130 = vrot.slane %v3129, 2
    %v3131 = vmax.f32 %v3129, %v3130
    %v3132 = vrot.slane %v3131, 1
    %v3133 = vmax.f32 %v3131, %v3132
    %v3134 = vsel %vm2965, %v3061, -inf
    %v3135 = vmax.f32 %v3060, %v3134
    %v3136 = vrot.slane %v3135, 4
    %v3137 = vmax.f32 %v3135, %v3136
    %v3138 = vrot.slane %v3137, 2
    %v3139 = vmax.f32 %v3137, %v3138
    %v3140 = vrot.slane %v3139, 1
    %v3141 = vmax.f32 %v3139, %v3140
    %v3142 = vsel %vm2965, %v3063, -inf
    %v3143 = vmax.f32 %v3062, %v3142
    %v3144 = vrot.slane %v3143, 4
    %v3145 = vmax.f32 %v3143, %v3144
    %v3146 = vrot.slane %v3145, 2
    %v3147 = vmax.f32 %v3145, %v3146
    %v3148 = vrot.slane %v3147, 1
    %v3149 = vmax.f32 %v3147, %v3148
    %v3150 = vsel %vm2965, %v3065, -inf
    %v3151 = vmax.f32 %v3064, %v3150
    %v3152 = vrot.slane %v3151, 4
    %v3153 = vmax.f32 %v3151, %v3152
    %v3154 = vrot.slane %v3153, 2
    %v3155 = vmax.f32 %v3153, %v3154
    %v3156 = vrot.slane %v3155, 1
    %v3157 = vmax.f32 %v3155, %v3156
    %v3158 = vsel %vm2965, %v3067, -inf
    %v3159 = vmax.f32 %v3066, %v3158
    %v3160 = vrot.slane %v3159, 4
    %v3161 = vmax.f32 %v3159, %v3160
    %v3162 = vrot.slane %v3161, 2
    %v3163 = vmax.f32 %v3161, %v3162
    %v3164 = vrot.slane %v3163, 1
    %v3165 = vmax.f32 %v3163, %v3164
    %v3166 = vsel %vm2965, %v3069, -inf
    %v3167 = vmax.f32 %v3068, %v3166
    %v3168 = vrot.slane %v3167, 4
    %v3169 = vmax.f32 %v3167, %v3168
    %v3170 = vrot.slane %v3169, 2
    %v3171 = vmax.f32 %v3169, %v3170
    %v3172 = vrot.slane %v3171, 1
    %v3173 = vmax.f32 %v3171, %v3172
    %v3174 = vsel %vm2965, %v3071, -inf
    %v3175 = vmax.f32 %v3070, %v3174
    %v3176 = vrot.slane %v3175, 4
    %v3177 = vmax.f32 %v3175, %v3176
    %v3178 = vrot.slane %v3177, 2
    %v3179 = vmax.f32 %v3177, %v3178
    %v3180 = vrot.slane %v3179, 1
    %v3181 = vmax.f32 %v3179, %v3180
    %v3182 = vsel %vm2965, %v3073, -inf
    %v3183 = vmax.f32 %v3072, %v3182
    %v3184 = vrot.slane %v3183, 4
    %v3185 = vmax.f32 %v3183, %v3184
    %v3186 = vrot.slane %v3185, 2
    %v3187 = vmax.f32 %v3185, %v3186
    %v3188 = vrot.slane %v3187, 1
    %v3189 = vmax.f32 %v3187, %v3188
    %v3190 = vsel %vm2965, %v3075, -inf
    %v3191 = vmax.f32 %v3074, %v3190
    %v3192 = vrot.slane %v3191, 4
    %v3193 = vmax.f32 %v3191, %v3192
    %v3194 = vrot.slane %v3193, 2
    %v3195 = vmax.f32 %v3193, %v3194
    %v3196 = vrot.slane %v3195, 1
    %v3197 = vmax.f32 %v3195, %v3196
    %v3198 = vsel %vm2965, %v3077, -inf
    %v3199 = vmax.f32 %v3076, %v3198
    %v3200 = vrot.slane %v3199, 4
    %v3201 = vmax.f32 %v3199, %v3200
    %v3202 = vrot.slane %v3201, 2
    %v3203 = vmax.f32 %v3201, %v3202
    %v3204 = vrot.slane %v3203, 1
    %v3205 = vmax.f32 %v3203, %v3204
    %vm3222 = vcmask 1041409
    %v3223 = vsel %vm3222, %v1827, %v1819
    %vm3224 = vcmask 1042434
    %v3225 = vsel %vm3224, %v1835, %v3223
    %vm3226 = vcmask 1043459
    %v3227 = vsel %vm3226, %v1843, %v3225
    %vm3228 = vcmask 1044484
    %v3229 = vsel %vm3228, %v1851, %v3227
    %vm3230 = vcmask 1045509
    %v3231 = vsel %vm3230, %v1859, %v3229
    %vm3232 = vcmask 1046534
    %v3233 = vsel %vm3232, %v1867, %v3231
    %vm3234 = vcmask 1047559
    %v3235 = vsel %vm3234, %v1875, %v3233
    %v3236 = vsel %vm3222, %v1891, %v1883
    %v3237 = vsel %vm3224, %v1899, %v3236
    %v3238 = vsel %vm3226, %v1907, %v3237
    %v3239 = vsel %vm3228, %v1915, %v3238
    %v3240 = vsel %vm3230, %v1923, %v3239
    %v3241 = vsel %vm3232, %v1931, %v3240
    %v3242 = vsel %vm3234, %v1939, %v3241
    %v3261 = vsel %vm3222, %v2388, %v2380
    %v3262 = vsel %vm3224, %v2396, %v3261
    %v3263 = vsel %vm3226, %v2404, %v3262
    %v3264 = vsel %vm3228, %v2412, %v3263
    %v3265 = vsel %vm3230, %v2420, %v3264
    %v3266 = vsel %vm3232, %v2428, %v3265
    %v3267 = vsel %vm3234, %v2436, %v3266
    %v3268 = vsel %vm3222, %v2452, %v2444
    %v3269 = vsel %vm3224, %v2460, %v3268
    %v3270 = vsel %vm3226, %v2468, %v3269
    %v3271 = vsel %vm3228, %v2476, %v3270
    %v3272 = vsel %vm3230, %v2484, %v3271
    %v3273 = vsel %vm3232, %v2492, %v3272
    %v3274 = vsel %vm3234, %v2500, %v3273
    %v3293 = vsel %vm3222, %v3093, %v3085
    %v3294 = vsel %vm3224, %v3101, %v3293
    %v3295 = vsel %vm3226, %v3109, %v3294
    %v3296 = vsel %vm3228, %v3117, %v3295
    %v3297 = vsel %vm3230, %v3125, %v3296
    %v3298 = vsel %vm3232, %v3133, %v3297
    %v3299 = vsel %vm3234, %v3141, %v3298
    %v3300 = vsel %vm3222, %v3157, %v3149
    %v3301 = vsel %vm3224, %v3165, %v3300
    %v3302 = vsel %vm3226, %v3173, %v3301
    %v3303 = vsel %vm3228, %v3181, %v3302
    %v3304 = vsel %vm3230, %v3189, %v3303
    %v3305 = vsel %vm3232, %v3197, %v3304
    %v3306 = vsel %vm3234, %v3205, %v3305
    %v3309 = vld [vmem:[%s2] sm:$0x7]
    %v3311 = vlaneseq
    %v3312 = vshrl.u32 %v3311, 7
    %v3313 = vsub.s32 0, %v3312
    %v3314 = vrot.slane %v3309, %v3313
    %v3315 = vlaneseq
    %v3316 = vshrl.u32 %v3315, 7
    %v3317 = vsub.s32 1, %v3316
    %v3318 = vrot.slane %v3309, %v3317
    %v3319 = vlaneseq
    %v3320 = vshrl.u32 %v3319, 7
    %v3321 = vsub.s32 2, %v3320
    %v3322 = vrot.slane %v3309, %v3321
    %v3326 = vadd.f32 %v3235, %v3314
    %v3327 = vadd.f32 %v3267, %v3318
    %v3328 = vadd.f32 %v3299, %v3322
    %v3329 = vadd.f32 %v3242, %v3314
    %v3330 = vadd.f32 %v3274, %v3318
    %v3331 = vadd.f32 %v3306, %v3322
    %v3332 = vmax.f32 %v3326, 0.0
    %v3333 = vmax.f32 %v3327, 0.0
    %v3334 = vmax.f32 %v3328, 0.0
    %v3335 = vmax.f32 %v3329, 0.0
    %v3336 = vmax.f32 %v3330, 0.0
    %v3337 = vmax.f32 %v3331, 0.0
    %v3338 = vld [vmem:[#allocation5] sm:$0xff]
    %v3339 = vld [vmem:[#allocation5 + $0x8] sm:$0xff]
    %v3340 = vld [vmem:[#allocation5 + $0x10] sm:$0xff]
    %v3341 = vld [vmem:[#allocation5 + $0x18] sm:$0xff]
    %v3342 = vld [vmem:[#allocation5 + $0x20] sm:$0xff]
    %v3343 = vld [vmem:[#allocation5 + $0x28] sm:$0xff]
    %v3344 = vld [vmem:[#allocation5 + $0x30] sm:$0xff]
    %v3345 = vld [vmem:[#allocation5 + $0x38] sm:$0xff]
    %v3346 = vld [vmem:[#allocation5 + $0x40] sm:$0xff]
    %v3347 = vld [vmem:[#allocation5 + $0x48] sm:$0xff]
    %v3348 = vld [vmem:[#allocation5 + $0x50] sm:$0xff]
    %v3349 = vld [vmem:[#allocation5 + $0x58] sm:$0xff]
    %v3350 = vld [vmem:[#allocation5 + $0x60] sm:$0xff]
    %v3351 = vld [vmem:[#allocation5 + $0x68] sm:$0xff]
    %v3352 = vld [vmem:[#allocation5 + $0x70] sm:$0xff]
    %v3353 = vld [vmem:[#allocation5 + $0x78] sm:$0xff]
    %v3354 = vld [vmem:[#allocation5 + $0x80] sm:$0xff]
    %v3355 = vld [vmem:[#allocation5 + $0x88] sm:$0xff]
    %v3356 = vld [vmem:[#allocation5 + $0x90] sm:$0xff]
    %v3357 = vld [vmem:[#allocation5 + $0x98] sm:$0xff]
    %v3358 = vld [vmem:[#allocation5 + $0xa0] sm:$0xff]
    %v3359 = vld [vmem:[#allocation5 + $0xa8] sm:$0xff]
    %v3360 = vld [vmem:[#allocation5 + $0xb0] sm:$0xff]
    %v3361 = vld [vmem:[#allocation5 + $0xb8] sm:$0xff]
    %v3362 = vld [vmem:[#allocation5 + $0xc0] sm:$0xff]
    %v3363 = vld [vmem:[#allocation5 + $0xc8] sm:$0xff]
    %v3364 = vld [vmem:[#allocation5 + $0xd0] sm:$0xff]
    %v3365 = vld [vmem:[#allocation5 + $0xd8] sm:$0xff]
    %v3366 = vld [vmem:[#allocation5 + $0xe0] sm:$0xff]
    %v3367 = vld [vmem:[#allocation5 + $0xe8] sm:$0xff]
    %v3368 = vld [vmem:[#allocation5 + $0xf0] sm:$0xff]
    %v3369 = vld [vmem:[#allocation5 + $0xf8] sm:$0xff]
    %v3370 = vld [vmem:[#allocation5 + $0x100] sm:$0xff]
    %v3371 = vld [vmem:[#allocation5 + $0x108] sm:$0xff]
    %v3372 = vld [vmem:[#allocation5 + $0x110] sm:$0xff]
    %v3373 = vld [vmem:[#allocation5 + $0x118] sm:$0xff]
    %v3374 = vld [vmem:[#allocation5 + $0x120] sm:$0xff]
    %v3375 = vld [vmem:[#allocation5 + $0x128] sm:$0xff]
    %v3376 = vld [vmem:[#allocation5 + $0x130] sm:$0xff]
    %v3377 = vld [vmem:[#allocation5 + $0x138] sm:$0xff]
    %v3378 = vld [vmem:[#allocation5 + $0x140] sm:$0xff]
    %v3379 = vld [vmem:[#allocation5 + $0x148] sm:$0xff]
    %v3380 = vld [vmem:[#allocation5 + $0x150] sm:$0xff]
    %v3381 = vld [vmem:[#allocation5 + $0x158] sm:$0xff]
    %v3382 = vld [vmem:[#allocation5 + $0x160] sm:$0xff]
    %v3383 = vld [vmem:[#allocation5 + $0x168] sm:$0xff]
    %v3384 = vld [vmem:[#allocation5 + $0x170] sm:$0xff]
    %v3385 = vld [vmem:[#allocation5 + $0x178] sm:$0xff]
    %v3386 = vld [vmem:[%s4] sm:$0x1]
    %v3388 = vlaneseq
    %v3389 = vshrl.u32 %v3388, 7
    %v3390 = vsub.s32 0, %v3389
    %v3391 = vrot.slane %v3386, %v3390
    %3393 = vmatprep.subr.mxu0 0.0
    %3394 = vmatpush1.msra.mxu0 %v3353
    %3395 = vmatprep.subr.mxu0 0.0
    %3396 = vmatpush1.msra.mxu0 %v3352
    %3397 = vmatprep.subr.mxu0 0.0
    %3398 = vmatpush1.msra.mxu0 %v3351
    %3399 = vmatprep.subr.mxu0 0.0
    %3400 = vmatpush1.msra.mxu0 %v3350
    %3401 = vmatprep.subr.mxu0 0.0
    %3402 = vmatpush1.msra.mxu0 %v3349
    %3403 = vmatprep.subr.mxu0 0.0
    %3404 = vmatpush1.msra.mxu0 %v3348
    %3405 = vmatprep.subr.mxu0 0.0
    %3406 = vmatpush1.msra.mxu0 %v3347
    %3407 = vmatprep.subr.mxu0 0.0
    %3408 = vmatpush1.msra.mxu0 %v3346
    %3409 = vmatprep.subr.mxu0 0.0
    %3410 = vmatpush1.msra.mxu0 %v3345
    %3411 = vmatprep.subr.mxu0 0.0
    %3412 = vmatpush1.msra.mxu0 %v3344
    %3413 = vmatprep.subr.mxu0 0.0
    %3414 = vmatpush1.msra.mxu0 %v3343
    %3415 = vmatprep.subr.mxu0 0.0
    %3416 = vmatpush1.msra.mxu0 %v3342
    %3417 = vmatprep.subr.mxu0 0.0
    %3418 = vmatpush1.msra.mxu0 %v3341
    %3419 = vmatprep.subr.mxu0 0.0
    %3420 = vmatpush1.msra.mxu0 %v3340
    %3421 = vmatprep.subr.mxu0 0.0
    %3422 = vmatpush1.msra.mxu0 %v3339
    %3423 = vmatprep.subr.mxu0 0.0
    %3424 = vmatpush1.msra.mxu0 %v3338
    %3425 = vmatprep.subr.mxu0 0.0
    %3426 = vmatpush2.msra.mxu0 %v3369
    %3427 = vmatprep.subr.mxu0 0.0
    %3428 = vmatpush2.msra.mxu0 %v3368
    %3429 = vmatprep.subr.mxu0 0.0
    %3430 = vmatpush2.msra.mxu0 %v3367
    %3431 = vmatprep.subr.mxu0 0.0
    %3432 = vmatpush2.msra.mxu0 %v3366
    %3433 = vmatprep.subr.mxu0 0.0
    %3434 = vmatpush2.msra.mxu0 %v3365
    %3435 = vmatprep.subr.mxu0 0.0
    %3436 = vmatpush2.msra.mxu0 %v3364
    %3437 = vmatprep.subr.mxu0 0.0
    %3438 = vmatpush2.msra.mxu0 %v3363
    %3439 = vmatprep.subr.mxu0 0.0
    %3440 = vmatpush2.msra.mxu0 %v3362
    %3441 = vmatprep.subr.mxu0 0.0
    %3442 = vmatpush2.msra.mxu0 %v3361
    %3443 = vmatprep.subr.mxu0 0.0
    %3444 = vmatpush2.msra.mxu0 %v3360
    %3445 = vmatprep.subr.mxu0 0.0
    %3446 = vmatpush2.msra.mxu0 %v3359
    %3447 = vmatprep.subr.mxu0 0.0
    %3448 = vmatpush2.msra.mxu0 %v3358
    %3449 = vmatprep.subr.mxu0 0.0
    %3450 = vmatpush2.msra.mxu0 %v3357
    %3451 = vmatprep.subr.mxu0 0.0
    %3452 = vmatpush2.msra.mxu0 %v3356
    %3453 = vmatprep.subr.mxu0 0.0
    %3454 = vmatpush2.msra.mxu0 %v3355
    %3455 = vmatprep.subr.mxu0 0.0
    %3456 = vmatpush2.msra.mxu0 %v3354
    %3457 = vmatprep.mubr.f32.mxu0 %v3333
    %3458 = vmatmul.mubr.f32.gmra.mxu0 %v3332
    %v3459 = vpop.f32.mrf.mxu0
    %v3460 = vadd.f32 %v3391, %v3459
    %v3461 = vpop.f32.mrf.mxu0
    %3462 = vmatprep.mubr.f32.mxu0 %v3336
    %3463 = vmatmul.mubr.f32.gmra.mxu0 %v3335
    %v3464 = vpop.f32.mrf.mxu0
    %v3465 = vadd.f32 %v3391, %v3464
    %v3466 = vpop.f32.mrf.mxu0
    %3467 = vdwg.mxu0
    %3468 = vmatprep.subr.mxu0 0.0
    %3469 = vmatpush1.msra.mxu0 %v3385
    %3470 = vmatprep.subr.mxu0 0.0
    %3471 = vmatpush1.msra.mxu0 %v3384
    %3472 = vmatprep.subr.mxu0 0.0
    %3473 = vmatpush1.msra.mxu0 %v3383
    %3474 = vmatprep.subr.mxu0 0.0
    %3475 = vmatpush1.msra.mxu0 %v3382
    %3476 = vmatprep.subr.mxu0 0.0
    %3477 = vmatpush1.msra.mxu0 %v3381
    %3478 = vmatprep.subr.mxu0 0.0
    %3479 = vmatpush1.msra.mxu0 %v3380
    %3480 = vmatprep.subr.mxu0 0.0
    %3481 = vmatpush1.msra.mxu0 %v3379
    %3482 = vmatprep.subr.mxu0 0.0
    %3483 = vmatpush1.msra.mxu0 %v3378
    %3484 = vmatprep.subr.mxu0 0.0
    %3485 = vmatpush1.msra.mxu0 %v3377
    %3486 = vmatprep.subr.mxu0 0.0
    %3487 = vmatpush1.msra.mxu0 %v3376
    %3488 = vmatprep.subr.mxu0 0.0
    %3489 = vmatpush1.msra.mxu0 %v3375
    %3490 = vmatprep.subr.mxu0 0.0
    %3491 = vmatpush1.msra.mxu0 %v3374
    %3492 = vmatprep.subr.mxu0 0.0
    %3493 = vmatpush1.msra.mxu0 %v3373
    %3494 = vmatprep.subr.mxu0 0.0
    %3495 = vmatpush1.msra.mxu0 %v3372
    %3496 = vmatprep.subr.mxu0 0.0
    %3497 = vmatpush1.msra.mxu0 %v3371
    %3498 = vmatprep.subr.mxu0 0.0
    %3499 = vmatpush1.msra.mxu0 %v3370
    %3500 = vmatprep.subr.mxu0 0.0
    %3501 = vmatpush2.msra.mxu0 0.0
    %3502 = vmatprep.subr.mxu0 0.0
    %3503 = vmatpush2.msra.mxu0 0.0
    %3504 = vmatprep.subr.mxu0 0.0
    %3505 = vmatpush2.msra.mxu0 0.0
    %3506 = vmatprep.subr.mxu0 0.0
    %3507 = vmatpush2.msra.mxu0 0.0
    %3508 = vmatprep.subr.mxu0 0.0
    %3509 = vmatpush2.msra.mxu0 0.0
    %3510 = vmatprep.subr.mxu0 0.0
    %3511 = vmatpush2.msra.mxu0 0.0
    %3512 = vmatprep.subr.mxu0 0.0
    %3513 = vmatpush2.msra.mxu0 0.0
    %3514 = vmatprep.subr.mxu0 0.0
    %3515 = vmatpush2.msra.mxu0 0.0
    %3516 = vmatprep.subr.mxu0 0.0
    %3517 = vmatpush2.msra.mxu0 0.0
    %3518 = vmatprep.subr.mxu0 0.0
    %3519 = vmatpush2.msra.mxu0 0.0
    %3520 = vmatprep.subr.mxu0 0.0
    %3521 = vmatpush2.msra.mxu0 0.0
    %3522 = vmatprep.subr.mxu0 0.0
    %3523 = vmatpush2.msra.mxu0 0.0
    %3524 = vmatprep.subr.mxu0 0.0
    %3525 = vmatpush2.msra.mxu0 0.0
    %3526 = vmatprep.subr.mxu0 0.0
    %3527 = vmatpush2.msra.mxu0 0.0
    %3528 = vmatprep.subr.mxu0 0.0
    %3529 = vmatpush2.msra.mxu0 0.0
    %3530 = vmatprep.subr.mxu0 0.0
    %3531 = vmatpush2.msra.mxu0 0.0
    %3532 = vmatprep.mubr.f32.mxu0 0.0
    %3533 = vmatmul.mubr.f32.gmra.mxu0 %v3334
    %v3534 = vpop.f32.mrf.mxu0
    %v3535 = vadd.f32 %v3460, %v3534
    %v3536 = vpop.f32.mrf.mxu0
    %3537 = vmatprep.mubr.f32.mxu0 0.0
    %3538 = vmatmul.mubr.f32.gmra.mxu0 %v3337
    %v3539 = vpop.f32.mrf.mxu0
    %v3540 = vadd.f32 %v3465, %v3539
    %v3541 = vpop.f32.mrf.mxu0
    %3542 = vdwg.mxu0
    %3543 = vst [vmem:[#allocation7] sm:$0xff] %v3535
    %3544 = vst [vmem:[#allocation7 + $0x8] sm:$0xff] %v3540
    %v3545 = vld [vmem:[%s5] sm:$0xff]
    %v3546 = vld [vmem:[%s5 + $0x8] sm:$0xff]
    %v3547 = vld [vmem:[%s5 + $0x10] sm:$0xff]
    %v3548 = vld [vmem:[%s5 + $0x18] sm:$0xff]
    %v3549 = vld [vmem:[%s5 + $0x20] sm:$0xff]
    %v3550 = vld [vmem:[%s5 + $0x28] sm:$0xff]
    %v3551 = vld [vmem:[%s5 + $0x30] sm:$0xff]
    %v3552 = vld [vmem:[%s5 + $0x38] sm:$0xff]
    %v3553 = vld [vmem:[%s5 + $0x40] sm:$0xff]
    %v3554 = vld [vmem:[%s5 + $0x48] sm:$0xff]
    %v3555 = vld [vmem:[%s5 + $0x50] sm:$0xff]
    %v3556 = vld [vmem:[%s5 + $0x58] sm:$0xff]
    %v3557 = vld [vmem:[%s5 + $0x60] sm:$0xff]
    %v3558 = vld [vmem:[%s5 + $0x68] sm:$0xff]
    %v3559 = vld [vmem:[%s5 + $0x70] sm:$0xff]
    %v3560 = vld [vmem:[%s5 + $0x78] sm:$0xff]
    %v3561 = vld [vmem:[%s6] sm:$0x1]
    %v3563 = vlaneseq
    %v3564 = vshrl.u32 %v3563, 7
    %v3565 = vsub.s32 0, %v3564
    %v3566 = vrot.slane %v3561, %v3565
    %3568 = vmatprep.subr.mxu0 0.0
    %3569 = vmatpush1.msra.mxu0 %v3560
    %3570 = vmatprep.subr.mxu0 0.0
    %3571 = vmatpush1.msra.mxu0 %v3559
    %3572 = vmatprep.subr.mxu0 0.0
    %3573 = vmatpush1.msra.mxu0 %v3558
    %3574 = vmatprep.subr.mxu0 0.0
    %3575 = vmatpush1.msra.mxu0 %v3557
    %3576 = vmatprep.subr.mxu0 0.0
    %3577 = vmatpush1.msra.mxu0 %v3556
    %3578 = vmatprep.subr.mxu0 0.0
    %3579 = vmatpush1.msra.mxu0 %v3555
    %3580 = vmatprep.subr.mxu0 0.0
    %3581 = vmatpush1.msra.mxu0 %v3554
    %3582 = vmatprep.subr.mxu0 0.0
    %3583 = vmatpush1.msra.mxu0 %v3553
    %3584 = vmatprep.subr.mxu0 0.0
    %3585 = vmatpush1.msra.mxu0 %v3552
    %3586 = vmatprep.subr.mxu0 0.0
    %3587 = vmatpush1.msra.mxu0 %v3551
    %3588 = vmatprep.subr.mxu0 0.0
    %3589 = vmatpush1.msra.mxu0 %v3550
    %3590 = vmatprep.subr.mxu0 0.0
    %3591 = vmatpush1.msra.mxu0 %v3549
    %3592 = vmatprep.subr.mxu0 0.0
    %3593 = vmatpush1.msra.mxu0 %v3548
    %3594 = vmatprep.subr.mxu0 0.0
    %3595 = vmatpush1.msra.mxu0 %v3547
    %3596 = vmatprep.subr.mxu0 0.0
    %3597 = vmatpush1.msra.mxu0 %v3546
    %3598 = vmatprep.subr.mxu0 0.0
    %3599 = vmatpush1.msra.mxu0 %v3545
    %3600 = vmatprep.subr.mxu0 0.0
    %3601 = vmatpush2.msra.mxu0 0.0
    %3602 = vmatprep.subr.mxu0 0.0
    %3603 = vmatpush2.msra.mxu0 0.0
    %3604 = vmatprep.subr.mxu0 0.0
    %3605 = vmatpush2.msra.mxu0 0.0
    %3606 = vmatprep.subr.mxu0 0.0
    %3607 = vmatpush2.msra.mxu0 0.0
    %3608 = vmatprep.subr.mxu0 0.0
    %3609 = vmatpush2.msra.mxu0 0.0
    %3610 = vmatprep.subr.mxu0 0.0
    %3611 = vmatpush2.msra.mxu0 0.0
    %3612 = vmatprep.subr.mxu0 0.0
    %3613 = vmatpush2.msra.mxu0 0.0
    %3614 = vmatprep.subr.mxu0 0.0
    %3615 = vmatpush2.msra.mxu0 0.0
    %3616 = vmatprep.subr.mxu0 0.0
    %3617 = vmatpush2.msra.mxu0 0.0
    %3618 = vmatprep.subr.mxu0 0.0
    %3619 = vmatpush2.msra.mxu0 0.0
    %3620 = vmatprep.subr.mxu0 0.0
    %3621 = vmatpush2.msra.mxu0 0.0
    %3622 = vmatprep.subr.mxu0 0.0
    %3623 = vmatpush2.msra.mxu0 0.0
    %3624 = vmatprep.subr.mxu0 0.0
    %3625 = vmatpush2.msra.mxu0 0.0
    %3626 = vmatprep.subr.mxu0 0.0
    %3627 = vmatpush2.msra.mxu0 0.0
    %3628 = vmatprep.subr.mxu0 0.0
    %3629 = vmatpush2.msra.mxu0 0.0
    %3630 = vmatprep.subr.mxu0 0.0
    %3631 = vmatpush2.msra.mxu0 0.0
    %3632 = vmatprep.mubr.f32.mxu0 0.0
    %3633 = vmatmul.mubr.f32.gmra.mxu0 %v3535
    %v3634 = vpop.f32.mrf.mxu0
    %v3635 = vadd.f32 %v3566, %v3634
    %v3636 = vpop.f32.mrf.mxu0
    %3637 = vmatprep.mubr.f32.mxu0 0.0
    %3638 = vmatmul.mubr.f32.gmra.mxu0 %v3540
    %v3639 = vpop.f32.mrf.mxu0
    %v3640 = vadd.f32 %v3566, %v3639
    %v3641 = vpop.f32.mrf.mxu0
    %3642 = vdwg.mxu0
    %3643 = vst [vmem:[#allocation8] sm:$0xff] %v3635
    %3644 = vst [vmem:[#allocation8 + $0x8] sm:$0xff] %v3640
    // Predicated region
    $region38: #{tpu_custom_call.1} parent=1 // pred_check
      _
    $region39: #{tpu_custom_call.1} parent=1 // pred_check_branch
      %3646 = sbr.rel (0) target = $region41
    $region40: #{tpu_custom_call.1} parent=1 // pred_region
      %s3648 = ssub.s32 256, 256
      %3649 = vsyncadd [#allocation4], %s3648
      %s3650 = sshll.u32 [#allocation7], 4
      %s3651 = int_to_ptr.vmem [resolvable:$true] %s3650
      %3656 = dma.vmem_to_hbm [thread:$0]  %s3651, 256, %s7, [#allocation4], 128, 128, 8
    $region41: #{tpu_custom_call.1} parent=1 // pred_fallthru
      _
    // Predicated region
    $region42: #{tpu_custom_call.1} parent=1 // pred_check
      _
    $region43: #{tpu_custom_call.1} parent=1 // pred_check_branch
      %3658 = sbr.rel (0) target = $region45
    $region44: #{tpu_custom_call.1} parent=1 // pred_region
      %s3660 = ssub.s32 256, 256
      %3661 = vsyncadd [#allocation9], %s3660
      %s3662 = sshll.u32 [#allocation8], 4
      %s3663 = int_to_ptr.vmem [resolvable:$true] %s3662
      %3668 = dma.vmem_to_hbm [thread:$0]  %s3663, 256, %s8, [#allocation9], 128, 128, 8
    $region45: #{tpu_custom_call.1} parent=1 // pred_fallthru
      _
    // Predicated region
    $region46: #{tpu_custom_call.1} parent=1 // pred_check
      _
    $region47: #{tpu_custom_call.1} parent=1 // pred_check_branch
      %3670 = sbr.rel (0) target = $region49
    $region48: #{tpu_custom_call.1} parent=1 // pred_region
      %3671 = dma.done [#allocation4], 256
    $region49: #{tpu_custom_call.1} parent=1 // pred_fallthru
      _
    // Predicated region
    $region50: #{tpu_custom_call.1} parent=1 // pred_check
      _
    $region51: #{tpu_custom_call.1} parent=1 // pred_check_branch
      %3673 = sbr.rel (0) target = $region53
    $region52: #{tpu_custom_call.1} parent=1 // pred_region
      %3674 = dma.done [#allocation9], 256
    $region53: #{tpu_custom_call.1} parent=1 // pred_fallthru
      _
    %3675 = vsyncpa [#allocation3], 1
    %3676 = vsyncpa [#allocation6], 1
    %3677 = vsyncpa [#allocation4], 1
    %3678 = vsyncpa [#allocation9], 1

</llo_original>
